<compile_context>
chip_gen: v6e
topology: v6e:2x2x1
jax: 0.10.0
libtpu: 0.0.40
codegen_flags: <defaults>
</compile_context>

<pallas_src>
import jax
import jax.numpy as jnp
from jax.experimental import pallas as pl
from jax.experimental.pallas import tpu as pltpu

# Synthetic constants (stand-ins for constant.ENCODER_HIDDEN_SIZE etc.)
ENCODER_HIDDEN_SIZE = 32   # input_size
UCF_FC_1 = 64
UCF_FC_2 = 32
UCF_CLASS = 16

_LANE = 128     # TPU lane width
_TB_MAX = 4096  # max batch-tile (working set ~5 MB << scoped VMEM on all gens)


def _round_up(v, m):
    return ((v + m - 1) // m) * m


def ucf_mlp_kernel(x_ref, w1_ref, b1_ref, w2_ref, b2_ref, w3_ref, b3_ref, o_ref):
    """Fused fc1->relu->fc2->relu->fc3->softmax on one batch tile.

    x_ref  : (TB, D)   input tile in natural (batch, feature) layout
    w*_ref : (out, in) PyTorch-layout weights (resident in VMEM)
    b*_ref : (out, 1)  biases as column tiles (broadcast across lanes)
    o_ref  : (C, TB)   softmax probabilities, class on sublanes / batch on lanes
    """
    hp = jax.lax.Precision.HIGHEST
    x = x_ref[...]                                            # (TB, D)

    # fc1 + ReLU:  W1 (H1, D) contracted with x (TB, D) on D -> (H1, TB).
    # Batch lands on the 128-wide lane axis without any wrapper transpose.
    h = jax.lax.dot_general(
        w1_ref[...], x,
        dimension_numbers=(((1,), (1,)), ((), ())),
        preferred_element_type=jnp.float32,
        precision=hp) + b1_ref[...]
    h = jnp.maximum(h, 0.0)

    # fc2 + ReLU   (H2, H1) @ (H1, TB) -> (H2, TB)
    h = jnp.dot(w2_ref[...], h, preferred_element_type=jnp.float32,
                precision=hp) + b2_ref[...]
    h = jnp.maximum(h, 0.0)

    # fc3 + numerically stable softmax over the class axis (axis 0 here).
    logits = jnp.dot(w3_ref[...], h, preferred_element_type=jnp.float32,
                     precision=hp) + b3_ref[...]
    m = jnp.max(logits, axis=0, keepdims=True)
    e = jnp.exp(logits - m)
    denom = jnp.sum(e, axis=0, keepdims=True)
    o_ref[...] = (e / denom).astype(o_ref.dtype)              # exact divide


def ucf_predictor_forward(x, w1, b1, w2, b2, w3, b3, *, batch_tile=None):
    """x: (B, D) float32.  Weights in PyTorch layout: w (out, in), b (out,).

    Returns (B, C) softmax probabilities, matching the PyTorch module's forward.
    """
    B, D = x.shape
    H1 = w1.shape[0]
    H2 = w2.shape[0]
    C = w3.shape[0]

    # ---- batch tile selection --------------------------------------------
    if batch_tile is not None:
        TB = batch_tile
    elif B <= 1024:
        # Single tile: block dims equal the full array dims -> always legal,
        # no padding, one grid step (launch latency dominates at this size).
        TB = B
    else:
        # Large batch: big lane-dense tiles to amortize per-step overhead,
        # but keep >= 2 grid steps so v7x megacore ("parallel") can split work.
        TB = min(_TB_MAX, _round_up(-(-B // 2), _LANE))
    assert TB % _LANE == 0 or TB == B, \
        "batch_tile must be a multiple of 128 or equal the batch size"
    grid = (pl.cdiv(B, TB),)   # ragged last block handled by Pallas masking

    # biases as (out, 1) columns -> broadcast across the lane (batch) axis
    b1c = b1.reshape(H1, 1)
    b2c = b2.reshape(H2, 1)
    b3c = b3.reshape(C, 1)

    # ---- advisory cost estimate for XLA's scheduler -----------------------
    flops = 2 * B * (D * H1 + H1 * H2 + H2 * C)
    bytes_accessed = 4 * (B * (D + C) + D * H1 + H1 * H2 + H2 * C + H1 + H2 + C)
    cost = pl.CostEstimate(flops=flops,
                           transcendentals=B * C,
                           bytes_accessed=bytes_accessed)

    out_t = pl.pallas_call(
        ucf_mlp_kernel,
        out_shape=jax.ShapeDtypeStruct((C, B), jnp.float32),
        grid_spec=pl.GridSpec(
            grid=grid,
            in_specs=[
                pl.BlockSpec((TB, D), lambda i: (i, 0)),     # x: natural layout, tiled on batch
                pl.BlockSpec((H1, D), lambda i: (0, 0)),     # W1: full, resident
                pl.BlockSpec((H1, 1), lambda i: (0, 0)),     # b1
                pl.BlockSpec((H2, H1), lambda i: (0, 0)),    # W2
                pl.BlockSpec((H2, 1), lambda i: (0, 0)),     # b2
                pl.BlockSpec((C, H2), lambda i: (0, 0)),     # W3
                pl.BlockSpec((C, 1), lambda i: (0, 0)),      # b3
            ],
            out_specs=pl.BlockSpec((C, TB), lambda i: (0, i)),  # lane-dense output
        ),
        compiler_params=pltpu.CompilerParams(
            # Batch-tile axis is independent -> megacore sharding on v7x.
            dimension_semantics=("parallel",),
        ),
        cost_estimate=cost,
    )(x, w1, b1c, w2, b2c, w3, b3c)

    # Module contract is (B, C); the small wrapper transpose is the accepted
    # cost (cheaper than masked (TB, 16) stores inside the kernel).
    return jnp.transpose(out_t)


def init_params(key, d_in, h1, h2, n_class):
    """Deterministic synthetic params in PyTorch nn.Linear layout: W (out,in), b (out,)."""
    ks = jax.random.split(key, 6)

    def lin(kw, kb, fan_in, fan_out):
        bound = 1.0 / jnp.sqrt(fan_in)
        w = jax.random.uniform(kw, (fan_out, fan_in), jnp.float32, -bound, bound)
        b = jax.random.uniform(kb, (fan_out,), jnp.float32, -bound, bound)
        return w, b

    w1, b1 = lin(ks[0], ks[1], d_in, h1)
    w2, b2 = lin(ks[2], ks[3], h1, h2)
    w3, b3 = lin(ks[4], ks[5], h2, n_class)
    return w1, b1, w2, b2, w3, b3


def reference_forward(x, w1, b1, w2, b2, w3, b3):
    hp = jax.lax.Precision.HIGHEST
    h = jnp.maximum(jnp.dot(x, w1.T, precision=hp) + b1, 0.0)
    h = jnp.maximum(jnp.dot(h, w2.T, precision=hp) + b2, 0.0)
    return jax.nn.softmax(jnp.dot(h, w3.T, precision=hp) + b3, axis=-1)


if __name__ == "__main__":
    key = jax.random.PRNGKey(0)
    k_x, k_p = jax.random.split(key)

    B = 8
    x = jax.random.normal(k_x, (B, ENCODER_HIDDEN_SIZE), dtype=jnp.float32)
    params = init_params(k_p, ENCODER_HIDDEN_SIZE, UCF_FC_1, UCF_FC_2, UCF_CLASS)

    out = ucf_predictor_forward(x, *params)
    out = jax.block_until_ready(out)

    ref = reference_forward(x, *params)
    assert out.shape == (B, UCF_CLASS)
    assert jnp.allclose(out, ref, atol=1e-5, rtol=1e-5), "mismatch vs reference"
    # exact divide -> softmax rows sum to 1 within f32 rounding
    assert jnp.allclose(jnp.sum(out, axis=-1), 1.0, atol=1e-5)

    print("KERNEL_OK")
</pallas_src>

<mosaic_0001>
module attributes {stable_mosaic.version = 11 : i64} {
  func.func @ucf_mlp_kernel(%arg0: i32, %arg1: memref<8x32xf32, #tpu.memory_space<vmem>>, %arg2: memref<64x32xf32, #tpu.memory_space<vmem>>, %arg3: memref<64x1xf32, #tpu.memory_space<vmem>>, %arg4: memref<32x64xf32, #tpu.memory_space<vmem>>, %arg5: memref<32x1xf32, #tpu.memory_space<vmem>>, %arg6: memref<16x32xf32, #tpu.memory_space<vmem>>, %arg7: memref<16x1xf32, #tpu.memory_space<vmem>>, %arg8: memref<16x8xf32, #tpu.memory_space<vmem>>) attributes {dimension_semantics = [#tpu.dimension_semantics<parallel>], iteration_bounds = array<i64: 1>, scalar_prefetch = 0 : i64, scratch_operands = 0 : i64, tpu.core_type = #tpu.core_type<tc>, window_params = [{transform_indices = @transform_0, window_bounds = array<i64: 8, 32>}, {pipeline_mode = #tpu.pipeline_mode<synchronous>, transform_indices = @transform_1, window_bounds = array<i64: 64, 32>}, {pipeline_mode = #tpu.pipeline_mode<synchronous>, transform_indices = @transform_2, window_bounds = array<i64: 64, 1>}, {pipeline_mode = #tpu.pipeline_mode<synchronous>, transform_indices = @transform_3, window_bounds = array<i64: 32, 64>}, {pipeline_mode = #tpu.pipeline_mode<synchronous>, transform_indices = @transform_4, window_bounds = array<i64: 32, 1>}, {pipeline_mode = #tpu.pipeline_mode<synchronous>, transform_indices = @transform_5, window_bounds = array<i64: 16, 32>}, {pipeline_mode = #tpu.pipeline_mode<synchronous>, transform_indices = @transform_6, window_bounds = array<i64: 16, 1>}, {transform_indices = @transform_7, window_bounds = array<i64: 16, 8>}]} {
    %c0 = arith.constant 0 : index
    %c0_0 = arith.constant 0 : index
    %0 = vector.load %arg1[%c0, %c0_0] : memref<8x32xf32, #tpu.memory_space<vmem>>, vector<8x32xf32>
    %c0_1 = arith.constant 0 : index
    %c0_2 = arith.constant 0 : index
    %1 = vector.load %arg2[%c0_1, %c0_2] : memref<64x32xf32, #tpu.memory_space<vmem>>, vector<64x32xf32>
    %cst = arith.constant dense<0.000000e+00> : vector<64x8xf32>
    %2 = tpu.matmul %1, %0, %cst {dimension_numbers = #tpu.dot_dimension_numbers<[1], [1], [0], [0], [0, 0, 1, 0], [], []>, precision = #tpu.contract_precision<fp32>} : vector<64x32xf32>, vector<8x32xf32>, vector<64x8xf32> -> vector<64x8xf32>
    %c0_3 = arith.constant 0 : index
    %c0_4 = arith.constant 0 : index
    %3 = vector.load %arg3[%c0_3, %c0_4] : memref<64x1xf32, #tpu.memory_space<vmem>>, vector<64x1xf32>
    %4 = vector.broadcast %3 : vector<64x1xf32> to vector<64x8xf32>
    %5 = arith.addf %2, %4 : vector<64x8xf32>
    %cst_5 = arith.constant 0.000000e+00 : f32
    %6 = vector.broadcast %cst_5 : f32 to vector<64x8xf32>
    %7 = arith.maximumf %5, %6 : vector<64x8xf32>
    %c0_6 = arith.constant 0 : index
    %c0_7 = arith.constant 0 : index
    %8 = vector.load %arg4[%c0_6, %c0_7] : memref<32x64xf32, #tpu.memory_space<vmem>>, vector<32x64xf32>
    %cst_8 = arith.constant dense<0.000000e+00> : vector<32x8xf32>
    %9 = tpu.matmul %8, %7, %cst_8 {dimension_numbers = #tpu.dot_dimension_numbers<[1], [0], [0], [1], [0, 0, 1, 1], [], []>, precision = #tpu.contract_precision<fp32>} : vector<32x64xf32>, vector<64x8xf32>, vector<32x8xf32> -> vector<32x8xf32>
    %c0_9 = arith.constant 0 : index
    %c0_10 = arith.constant 0 : index
    %10 = vector.load %arg5[%c0_9, %c0_10] : memref<32x1xf32, #tpu.memory_space<vmem>>, vector<32x1xf32>
    %11 = vector.broadcast %10 : vector<32x1xf32> to vector<32x8xf32>
    %12 = arith.addf %9, %11 : vector<32x8xf32>
    %cst_11 = arith.constant 0.000000e+00 : f32
    %13 = vector.broadcast %cst_11 : f32 to vector<32x8xf32>
    %14 = arith.maximumf %12, %13 : vector<32x8xf32>
    %c0_12 = arith.constant 0 : index
    %c0_13 = arith.constant 0 : index
    %15 = vector.load %arg6[%c0_12, %c0_13] : memref<16x32xf32, #tpu.memory_space<vmem>>, vector<16x32xf32>
    %cst_14 = arith.constant dense<0.000000e+00> : vector<16x8xf32>
    %16 = tpu.matmul %15, %14, %cst_14 {dimension_numbers = #tpu.dot_dimension_numbers<[1], [0], [0], [1], [0, 0, 1, 1], [], []>, precision = #tpu.contract_precision<fp32>} : vector<16x32xf32>, vector<32x8xf32>, vector<16x8xf32> -> vector<16x8xf32>
    %c0_15 = arith.constant 0 : index
    %c0_16 = arith.constant 0 : index
    %17 = vector.load %arg7[%c0_15, %c0_16] : memref<16x1xf32, #tpu.memory_space<vmem>>, vector<16x1xf32>
    %18 = vector.broadcast %17 : vector<16x1xf32> to vector<16x8xf32>
    %19 = arith.addf %16, %18 : vector<16x8xf32>
    %cst_17 = arith.constant dense<0xFF800000> : vector<8xf32>
    %20 = vector.multi_reduction <maximumf>, %19, %cst_17 [0] : vector<16x8xf32> to vector<8xf32>
    %21 = vector.shape_cast %20 : vector<8xf32> to vector<1x8xf32>
    %22 = vector.broadcast %21 : vector<1x8xf32> to vector<16x8xf32>
    %23 = arith.subf %19, %22 : vector<16x8xf32>
    %24 = math.exp %23 : vector<16x8xf32>
    %cst_18 = arith.constant dense<0.000000e+00> : vector<8xf32>
    %25 = vector.multi_reduction <add>, %24, %cst_18 [0] : vector<16x8xf32> to vector<8xf32>
    %26 = vector.shape_cast %25 : vector<8xf32> to vector<1x8xf32>
    %27 = vector.broadcast %26 : vector<1x8xf32> to vector<16x8xf32>
    %28 = arith.divf %24, %27 : vector<16x8xf32>
    %c0_19 = arith.constant 0 : index
    %c0_20 = arith.constant 0 : index
    %29 = vector.load %arg8[%c0_19, %c0_20] : memref<16x8xf32, #tpu.memory_space<vmem>>, vector<16x8xf32>
    tpu.vector_store %arg8[%c0_19, %c0_20], %28 {strides = array<i32>} : memref<16x8xf32, #tpu.memory_space<vmem>>, vector<16x8xf32>,
    return
  }
  func.func @transform_0(%arg0: i32) -> (i32, i32) {
    %c0_i32 = arith.constant 0 : i32
    %c0_i32_0 = arith.constant 0 : i32
    return %arg0, %c0_i32 : i32, i32
  }
  func.func @transform_1(%arg0: i32) -> (i32, i32) {
    %c0_i32 = arith.constant 0 : i32
    %c0_i32_0 = arith.constant 0 : i32
    %c0_i32_1 = arith.constant 0 : i32
    return %c0_i32, %c0_i32_0 : i32, i32
  }
  func.func @transform_2(%arg0: i32) -> (i32, i32) {
    %c0_i32 = arith.constant 0 : i32
    %c0_i32_0 = arith.constant 0 : i32
    %c0_i32_1 = arith.constant 0 : i32
    return %c0_i32, %c0_i32_0 : i32, i32
  }
  func.func @transform_3(%arg0: i32) -> (i32, i32) {
    %c0_i32 = arith.constant 0 : i32
    %c0_i32_0 = arith.constant 0 : i32
    %c0_i32_1 = arith.constant 0 : i32
    return %c0_i32, %c0_i32_0 : i32, i32
  }
  func.func @transform_4(%arg0: i32) -> (i32, i32) {
    %c0_i32 = arith.constant 0 : i32
    %c0_i32_0 = arith.constant 0 : i32
    %c0_i32_1 = arith.constant 0 : i32
    return %c0_i32, %c0_i32_0 : i32, i32
  }
  func.func @transform_5(%arg0: i32) -> (i32, i32) {
    %c0_i32 = arith.constant 0 : i32
    %c0_i32_0 = arith.constant 0 : i32
    %c0_i32_1 = arith.constant 0 : i32
    return %c0_i32, %c0_i32_0 : i32, i32
  }
  func.func @transform_6(%arg0: i32) -> (i32, i32) {
    %c0_i32 = arith.constant 0 : i32
    %c0_i32_0 = arith.constant 0 : i32
    %c0_i32_1 = arith.constant 0 : i32
    return %c0_i32, %c0_i32_0 : i32, i32
  }
  func.func @transform_7(%arg0: i32) -> (i32, i32) {
    %c0_i32 = arith.constant 0 : i32
    %c0_i32_0 = arith.constant 0 : i32
    return %c0_i32, %arg0 : i32, i32
  }
}

</mosaic_0001>

<llo_original>
// kernel: tpu_custom_call.1
$region0: #{tpu_custom_call.1}
  #allocation0 [shape = 'u32[]', space=smem, size = 0x4, offset = 0x4, fixed_abs, tag = 'smem constant byte address 0x4 - core index']
  #allocation1 [shape = 'u32[144,128]{1,0:T(1,128)}', space=vmem, size = 0x12000, scoped, tag = 'internal scratch']
  %s0 = inlined_call_operand.vmem [shape: f32[8,32], index: 0, kind: input, shape index: {}]
  %s1 = inlined_call_operand.vmem [shape: f32[64,32], index: 1, kind: input, shape index: {}]
  %s2 = inlined_call_operand.vmem [shape: f32[64,1], index: 2, kind: input, shape index: {}]
  %s3 = inlined_call_operand.vmem [shape: f32[32,64], index: 3, kind: input, shape index: {}]
  %s4 = inlined_call_operand.vmem [shape: f32[32,1], index: 4, kind: input, shape index: {}]
  %s5 = inlined_call_operand.vmem [shape: f32[16,32], index: 5, kind: input, shape index: {}]
  %s6 = inlined_call_operand.vmem [shape: f32[16,1], index: 6, kind: input, shape index: {}]
  %s7 = inlined_call_operand.vmem [shape: f32[16,8], index: 7, kind: output, shape index: {}]
  %s8 = sld [smem:[#allocation0]]
  $region38: #{tpu_custom_call.1} parent=0
    _
  %s10 = ssub.s32 1, %s8
  %s11 = scalar_select 0, %s10, %s8
  // Predicated region
  $region2: #{tpu_custom_call.1} parent=0 // pred_check
    _
  $region3: #{tpu_custom_call.1} parent=0 // pred_check_branch
    %13 = sbr.rel (0) target = $region5
  $region4: #{tpu_custom_call.1} parent=0 // pred_region
    _
  $region5: #{tpu_custom_call.1} parent=0 // pred_fallthru
    _
  // Predicated region
  $region6: #{tpu_custom_call.1} parent=0 // pred_check
    _
  $region7: #{tpu_custom_call.1} parent=0 // pred_check_branch
    %15 = sbr.rel (0) target = $region9
  $region8: #{tpu_custom_call.1} parent=0 // pred_region
    _
  $region9: #{tpu_custom_call.1} parent=0 // pred_fallthru
    _
  // Predicated region
  $region10: #{tpu_custom_call.1} parent=0 // pred_check
    _
  $region11: #{tpu_custom_call.1} parent=0 // pred_check_branch
    %17 = sbr.rel (0) target = $region13
  $region12: #{tpu_custom_call.1} parent=0 // pred_region
    _
  $region13: #{tpu_custom_call.1} parent=0 // pred_fallthru
    _
  // Predicated region
  $region14: #{tpu_custom_call.1} parent=0 // pred_check
    _
  $region15: #{tpu_custom_call.1} parent=0 // pred_check_branch
    %19 = sbr.rel (0) target = $region17
  $region16: #{tpu_custom_call.1} parent=0 // pred_region
    _
  $region17: #{tpu_custom_call.1} parent=0 // pred_fallthru
    _
  // Predicated region
  $region18: #{tpu_custom_call.1} parent=0 // pred_check
    _
  $region19: #{tpu_custom_call.1} parent=0 // pred_check_branch
    %21 = sbr.rel (0) target = $region21
  $region20: #{tpu_custom_call.1} parent=0 // pred_region
    _
  $region21: #{tpu_custom_call.1} parent=0 // pred_fallthru
    _
  // Predicated region
  $region22: #{tpu_custom_call.1} parent=0 // pred_check
    _
  $region23: #{tpu_custom_call.1} parent=0 // pred_check_branch
    %23 = sbr.rel (0) target = $region25
  $region24: #{tpu_custom_call.1} parent=0 // pred_region
    _
  $region25: #{tpu_custom_call.1} parent=0 // pred_fallthru
    _
  // Predicated region
  $region26: #{tpu_custom_call.1} parent=0 // pred_check
    _
  $region27: #{tpu_custom_call.1} parent=0 // pred_check_branch
    %25 = sbr.rel (0) target = $region29
  $region28: #{tpu_custom_call.1} parent=0 // pred_region
    _
  $region29: #{tpu_custom_call.1} parent=0 // pred_fallthru
    _
  %v26 = vld [vmem:[%s0] sm:$0xff]
  %v27 = vld [vmem:[%s1] sm:$0xff]
  %v28 = vld [vmem:[%s1 + $0x8] sm:$0xff]
  %v29 = vld [vmem:[%s1 + $0x10] sm:$0xff]
  %v30 = vld [vmem:[%s1 + $0x18] sm:$0xff]
  %v31 = vld [vmem:[%s1 + $0x20] sm:$0xff]
  %v32 = vld [vmem:[%s1 + $0x28] sm:$0xff]
  %v33 = vld [vmem:[%s1 + $0x30] sm:$0xff]
  %v34 = vld [vmem:[%s1 + $0x38] sm:$0xff]
  %v35 = vld [vmem:[%s2] sm:$0xff]
  %v36 = vld [vmem:[%s2 + $0x8] sm:$0xff]
  %v37 = vld [vmem:[%s2 + $0x10] sm:$0xff]
  %v38 = vld [vmem:[%s2 + $0x18] sm:$0xff]
  %v39 = vld [vmem:[%s2 + $0x20] sm:$0xff]
  %v40 = vld [vmem:[%s2 + $0x28] sm:$0xff]
  %v41 = vld [vmem:[%s2 + $0x30] sm:$0xff]
  %v42 = vld [vmem:[%s2 + $0x38] sm:$0xff]
  %44 = vset.pattern.permute.xlu0 0
  %45 = vperm.xlu0 %44, %v35
  %v46 = vpop.permute.xlu0 %45
  %49 = vset.pattern.permute.xlu0 0
  %50 = vperm.xlu0 %49, %v36
  %v51 = vpop.permute.xlu0 %50
  %54 = vset.pattern.permute.xlu0 0
  %55 = vperm.xlu0 %54, %v37
  %v56 = vpop.permute.xlu0 %55
  %59 = vset.pattern.permute.xlu0 0
  %60 = vperm.xlu0 %59, %v38
  %v61 = vpop.permute.xlu0 %60
  %64 = vset.pattern.permute.xlu0 0
  %65 = vperm.xlu0 %64, %v39
  %v66 = vpop.permute.xlu0 %65
  %69 = vset.pattern.permute.xlu0 0
  %70 = vperm.xlu0 %69, %v40
  %v71 = vpop.permute.xlu0 %70
  %74 = vset.pattern.permute.xlu0 0
  %75 = vperm.xlu0 %74, %v41
  %v76 = vpop.permute.xlu0 %75
  %79 = vset.pattern.permute.xlu0 0
  %80 = vperm.xlu0 %79, %v42
  %v81 = vpop.permute.xlu0 %80
  %vm83 = vcmask 261120
  %v85 = vsel %vm83, %v27, 0
  %v88 = vsel %vm83, %v28, 0
  %v91 = vsel %vm83, %v29, 0
  %v94 = vsel %vm83, %v30, 0
  %v97 = vsel %vm83, %v31, 0
  %v100 = vsel %vm83, %v32, 0
  %v103 = vsel %vm83, %v33, 0
  %v106 = vsel %vm83, %v34, 0
  %v109 = vsel %vm83, %v26, 0
  %111 = vmatprep.subr.mxu0 0.0
  %112 = vmatpush1.xpose.msra.mxu0 0.0
  %113 = vmatprep.subr.mxu0 0.0
  %114 = vmatpush1.xpose.msra.mxu0 0.0
  %115 = vmatprep.subr.mxu0 0.0
  %116 = vmatpush1.xpose.msra.mxu0 0.0
  %117 = vmatprep.subr.mxu0 0.0
  %118 = vmatpush1.xpose.msra.mxu0 0.0
  %119 = vmatprep.subr.mxu0 0.0
  %120 = vmatpush1.xpose.msra.mxu0 0.0
  %121 = vmatprep.subr.mxu0 0.0
  %122 = vmatpush1.xpose.msra.mxu0 0.0
  %123 = vmatprep.subr.mxu0 0.0
  %124 = vmatpush1.xpose.msra.mxu0 0.0
  %125 = vmatprep.subr.mxu0 0.0
  %126 = vmatpush1.xpose.msra.mxu0 0.0
  %127 = vmatprep.subr.mxu0 0.0
  %128 = vmatpush1.xpose.msra.mxu0 0.0
  %129 = vmatprep.subr.mxu0 0.0
  %130 = vmatpush1.xpose.msra.mxu0 0.0
  %131 = vmatprep.subr.mxu0 0.0
  %132 = vmatpush1.xpose.msra.mxu0 0.0
  %133 = vmatprep.subr.mxu0 0.0
  %134 = vmatpush1.xpose.msra.mxu0 0.0
  %135 = vmatprep.subr.mxu0 0.0
  %136 = vmatpush1.xpose.msra.mxu0 0.0
  %137 = vmatprep.subr.mxu0 0.0
  %138 = vmatpush1.xpose.msra.mxu0 0.0
  %139 = vmatprep.subr.mxu0 0.0
  %140 = vmatpush1.xpose.msra.mxu0 0.0
  %141 = vmatprep.subr.mxu0 0.0
  %v142 = vand.u32 %v109, 4294901760
  %143 = vmatpush1.xpose.msra.mxu0 %v142
  %144 = vmatprep.subr.mxu0 0.0
  %145 = vmatpush2.xpose.msra.mxu0 0.0
  %146 = vmatprep.subr.mxu0 0.0
  %147 = vmatpush2.xpose.msra.mxu0 0.0
  %148 = vmatprep.subr.mxu0 0.0
  %149 = vmatpush2.xpose.msra.mxu0 0.0
  %150 = vmatprep.subr.mxu0 0.0
  %151 = vmatpush2.xpose.msra.mxu0 0.0
  %152 = vmatprep.subr.mxu0 0.0
  %153 = vmatpush2.xpose.msra.mxu0 0.0
  %154 = vmatprep.subr.mxu0 0.0
  %155 = vmatpush2.xpose.msra.mxu0 0.0
  %156 = vmatprep.subr.mxu0 0.0
  %157 = vmatpush2.xpose.msra.mxu0 0.0
  %158 = vmatprep.subr.mxu0 0.0
  %159 = vmatpush2.xpose.msra.mxu0 0.0
  %160 = vmatprep.subr.mxu0 0.0
  %161 = vmatpush2.xpose.msra.mxu0 0.0
  %162 = vmatprep.subr.mxu0 0.0
  %163 = vmatpush2.xpose.msra.mxu0 0.0
  %164 = vmatprep.subr.mxu0 0.0
  %165 = vmatpush2.xpose.msra.mxu0 0.0
  %166 = vmatprep.subr.mxu0 0.0
  %167 = vmatpush2.xpose.msra.mxu0 0.0
  %168 = vmatprep.subr.mxu0 0.0
  %169 = vmatpush2.xpose.msra.mxu0 0.0
  %170 = vmatprep.subr.mxu0 0.0
  %171 = vmatpush2.xpose.msra.mxu0 0.0
  %172 = vmatprep.subr.mxu0 0.0
  %173 = vmatpush2.xpose.msra.mxu0 0.0
  %174 = vmatprep.subr.mxu0 0.0
  %175 = vmatpush2.xpose.msra.mxu0 0.0
  %176 = vmatprep.mubr.f32.mxu0 0.0
  %v177 = vand.u32 %v85, 4294901760
  %v178 = vsub.f32 %v85, %v177
  %v179 = vand.u32 %v178, 4294901760
  %v180 = vsub.f32 %v178, %v179
  %v181 = vand.u32 %v180, 4294901760
  %182 = vmatmul.mubr.f32.gmra.mxu0 %v181
  %v183 = vpop.f32.mrf.mxu0
  %v184 = vadd.f32 %v46, %v183
  %v185 = vpop.f32.mrf.mxu0
  %186 = vmatprep.mubr.f32.mxu0 0.0
  %v187 = vand.u32 %v88, 4294901760
  %v188 = vsub.f32 %v88, %v187
  %v189 = vand.u32 %v188, 4294901760
  %v190 = vsub.f32 %v188, %v189
  %v191 = vand.u32 %v190, 4294901760
  %192 = vmatmul.mubr.f32.gmra.mxu0 %v191
  %v193 = vpop.f32.mrf.mxu0
  %v194 = vadd.f32 %v51, %v193
  %v195 = vpop.f32.mrf.mxu0
  %196 = vmatprep.mubr.f32.mxu0 0.0
  %v197 = vand.u32 %v91, 4294901760
  %v198 = vsub.f32 %v91, %v197
  %v199 = vand.u32 %v198, 4294901760
  %v200 = vsub.f32 %v198, %v199
  %v201 = vand.u32 %v200, 4294901760
  %202 = vmatmul.mubr.f32.gmra.mxu0 %v201
  %v203 = vpop.f32.mrf.mxu0
  %v204 = vadd.f32 %v56, %v203
  %v205 = vpop.f32.mrf.mxu0
  %206 = vmatprep.mubr.f32.mxu0 0.0
  %v207 = vand.u32 %v94, 4294901760
  %v208 = vsub.f32 %v94, %v207
  %v209 = vand.u32 %v208, 4294901760
  %v210 = vsub.f32 %v208, %v209
  %v211 = vand.u32 %v210, 4294901760
  %212 = vmatmul.mubr.f32.gmra.mxu0 %v211
  %v213 = vpop.f32.mrf.mxu0
  %v214 = vadd.f32 %v61, %v213
  %v215 = vpop.f32.mrf.mxu0
  %216 = vmatprep.mubr.f32.mxu0 0.0
  %v217 = vand.u32 %v97, 4294901760
  %v218 = vsub.f32 %v97, %v217
  %v219 = vand.u32 %v218, 4294901760
  %v220 = vsub.f32 %v218, %v219
  %v221 = vand.u32 %v220, 4294901760
  %222 = vmatmul.mubr.f32.gmra.mxu0 %v221
  %v223 = vpop.f32.mrf.mxu0
  %v224 = vadd.f32 %v66, %v223
  %v225 = vpop.f32.mrf.mxu0
  %226 = vmatprep.mubr.f32.mxu0 0.0
  %v227 = vand.u32 %v100, 4294901760
  %v228 = vsub.f32 %v100, %v227
  %v229 = vand.u32 %v228, 4294901760
  %v230 = vsub.f32 %v228, %v229
  %v231 = vand.u32 %v230, 4294901760
  %232 = vmatmul.mubr.f32.gmra.mxu0 %v231
  %v233 = vpop.f32.mrf.mxu0
  %v234 = vadd.f32 %v71, %v233
  %v235 = vpop.f32.mrf.mxu0
  %236 = vmatprep.mubr.f32.mxu0 0.0
  %v237 = vand.u32 %v103, 4294901760
  %v238 = vsub.f32 %v103, %v237
  %v239 = vand.u32 %v238, 4294901760
  %v240 = vsub.f32 %v238, %v239
  %v241 = vand.u32 %v240, 4294901760
  %242 = vmatmul.mubr.f32.gmra.mxu0 %v241
  %v243 = vpop.f32.mrf.mxu0
  %v244 = vadd.f32 %v76, %v243
  %v245 = vpop.f32.mrf.mxu0
  %246 = vmatprep.mubr.f32.mxu0 0.0
  %v247 = vand.u32 %v106, 4294901760
  %v248 = vsub.f32 %v106, %v247
  %v249 = vand.u32 %v248, 4294901760
  %v250 = vsub.f32 %v248, %v249
  %v251 = vand.u32 %v250, 4294901760
  %252 = vmatmul.mubr.f32.gmra.mxu0 %v251
  %v253 = vpop.f32.mrf.mxu0
  %v254 = vadd.f32 %v81, %v253
  %v255 = vpop.f32.mrf.mxu0
  %256 = vdwg.mxu0
  %257 = vmatprep.subr.mxu0 0.0
  %258 = vmatpush1.xpose.msra.mxu0 0.0
  %259 = vmatprep.subr.mxu0 0.0
  %260 = vmatpush1.xpose.msra.mxu0 0.0
  %261 = vmatprep.subr.mxu0 0.0
  %262 = vmatpush1.xpose.msra.mxu0 0.0
  %263 = vmatprep.subr.mxu0 0.0
  %264 = vmatpush1.xpose.msra.mxu0 0.0
  %265 = vmatprep.subr.mxu0 0.0
  %266 = vmatpush1.xpose.msra.mxu0 0.0
  %267 = vmatprep.subr.mxu0 0.0
  %268 = vmatpush1.xpose.msra.mxu0 0.0
  %269 = vmatprep.subr.mxu0 0.0
  %270 = vmatpush1.xpose.msra.mxu0 0.0
  %271 = vmatprep.subr.mxu0 0.0
  %272 = vmatpush1.xpose.msra.mxu0 0.0
  %273 = vmatprep.subr.mxu0 0.0
  %274 = vmatpush1.xpose.msra.mxu0 0.0
  %275 = vmatprep.subr.mxu0 0.0
  %276 = vmatpush1.xpose.msra.mxu0 0.0
  %277 = vmatprep.subr.mxu0 0.0
  %278 = vmatpush1.xpose.msra.mxu0 0.0
  %279 = vmatprep.subr.mxu0 0.0
  %280 = vmatpush1.xpose.msra.mxu0 0.0
  %281 = vmatprep.subr.mxu0 0.0
  %282 = vmatpush1.xpose.msra.mxu0 0.0
  %283 = vmatprep.subr.mxu0 0.0
  %284 = vmatpush1.xpose.msra.mxu0 0.0
  %285 = vmatprep.subr.mxu0 0.0
  %286 = vmatpush1.xpose.msra.mxu0 0.0
  %287 = vmatprep.subr.mxu0 0.0
  %v288 = vand.u32 %v109, 4294901760
  %v289 = vsub.f32 %v109, %v288
  %v290 = vand.u32 %v289, 4294901760
  %v291 = vsub.f32 %v289, %v290
  %v292 = vand.u32 %v291, 4294901760
  %293 = vmatpush1.xpose.msra.mxu0 %v292
  %294 = vmatprep.subr.mxu0 0.0
  %295 = vmatpush2.xpose.msra.mxu0 0.0
  %296 = vmatprep.subr.mxu0 0.0
  %297 = vmatpush2.xpose.msra.mxu0 0.0
  %298 = vmatprep.subr.mxu0 0.0
  %299 = vmatpush2.xpose.msra.mxu0 0.0
  %300 = vmatprep.subr.mxu0 0.0
  %301 = vmatpush2.xpose.msra.mxu0 0.0
  %302 = vmatprep.subr.mxu0 0.0
  %303 = vmatpush2.xpose.msra.mxu0 0.0
  %304 = vmatprep.subr.mxu0 0.0
  %305 = vmatpush2.xpose.msra.mxu0 0.0
  %306 = vmatprep.subr.mxu0 0.0
  %307 = vmatpush2.xpose.msra.mxu0 0.0
  %308 = vmatprep.subr.mxu0 0.0
  %309 = vmatpush2.xpose.msra.mxu0 0.0
  %310 = vmatprep.subr.mxu0 0.0
  %311 = vmatpush2.xpose.msra.mxu0 0.0
  %312 = vmatprep.subr.mxu0 0.0
  %313 = vmatpush2.xpose.msra.mxu0 0.0
  %314 = vmatprep.subr.mxu0 0.0
  %315 = vmatpush2.xpose.msra.mxu0 0.0
  %316 = vmatprep.subr.mxu0 0.0
  %317 = vmatpush2.xpose.msra.mxu0 0.0
  %318 = vmatprep.subr.mxu0 0.0
  %319 = vmatpush2.xpose.msra.mxu0 0.0
  %320 = vmatprep.subr.mxu0 0.0
  %321 = vmatpush2.xpose.msra.mxu0 0.0
  %322 = vmatprep.subr.mxu0 0.0
  %323 = vmatpush2.xpose.msra.mxu0 0.0
  %324 = vmatprep.subr.mxu0 0.0
  %325 = vmatpush2.xpose.msra.mxu0 0.0
  %326 = vmatprep.mubr.f32.mxu0 0.0
  %v327 = vand.u32 %v85, 4294901760
  %328 = vmatmul.mubr.f32.gmra.mxu0 %v327
  %v329 = vpop.f32.mrf.mxu0
  %v330 = vadd.f32 %v184, %v329
  %v331 = vpop.f32.mrf.mxu0
  %332 = vmatprep.mubr.f32.mxu0 0.0
  %v333 = vand.u32 %v88, 4294901760
  %334 = vmatmul.mubr.f32.gmra.mxu0 %v333
  %v335 = vpop.f32.mrf.mxu0
  %v336 = vadd.f32 %v194, %v335
  %v337 = vpop.f32.mrf.mxu0
  %338 = vmatprep.mubr.f32.mxu0 0.0
  %v339 = vand.u32 %v91, 4294901760
  %340 = vmatmul.mubr.f32.gmra.mxu0 %v339
  %v341 = vpop.f32.mrf.mxu0
  %v342 = vadd.f32 %v204, %v341
  %v343 = vpop.f32.mrf.mxu0
  %344 = vmatprep.mubr.f32.mxu0 0.0
  %v345 = vand.u32 %v94, 4294901760
  %346 = vmatmul.mubr.f32.gmra.mxu0 %v345
  %v347 = vpop.f32.mrf.mxu0
  %v348 = vadd.f32 %v214, %v347
  %v349 = vpop.f32.mrf.mxu0
  %350 = vmatprep.mubr.f32.mxu0 0.0
  %v351 = vand.u32 %v97, 4294901760
  %352 = vmatmul.mubr.f32.gmra.mxu0 %v351
  %v353 = vpop.f32.mrf.mxu0
  %v354 = vadd.f32 %v224, %v353
  %v355 = vpop.f32.mrf.mxu0
  %356 = vmatprep.mubr.f32.mxu0 0.0
  %v357 = vand.u32 %v100, 4294901760
  %358 = vmatmul.mubr.f32.gmra.mxu0 %v357
  %v359 = vpop.f32.mrf.mxu0
  %v360 = vadd.f32 %v234, %v359
  %v361 = vpop.f32.mrf.mxu0
  %362 = vmatprep.mubr.f32.mxu0 0.0
  %v363 = vand.u32 %v103, 4294901760
  %364 = vmatmul.mubr.f32.gmra.mxu0 %v363
  %v365 = vpop.f32.mrf.mxu0
  %v366 = vadd.f32 %v244, %v365
  %v367 = vpop.f32.mrf.mxu0
  %368 = vmatprep.mubr.f32.mxu0 0.0
  %v369 = vand.u32 %v106, 4294901760
  %370 = vmatmul.mubr.f32.gmra.mxu0 %v369
  %v371 = vpop.f32.mrf.mxu0
  %v372 = vadd.f32 %v254, %v371
  %v373 = vpop.f32.mrf.mxu0
  %374 = vdwg.mxu0
  %375 = vmatprep.subr.mxu0 0.0
  %376 = vmatpush1.xpose.msra.mxu0 0.0
  %377 = vmatprep.subr.mxu0 0.0
  %378 = vmatpush1.xpose.msra.mxu0 0.0
  %379 = vmatprep.subr.mxu0 0.0
  %380 = vmatpush1.xpose.msra.mxu0 0.0
  %381 = vmatprep.subr.mxu0 0.0
  %382 = vmatpush1.xpose.msra.mxu0 0.0
  %383 = vmatprep.subr.mxu0 0.0
  %384 = vmatpush1.xpose.msra.mxu0 0.0
  %385 = vmatprep.subr.mxu0 0.0
  %386 = vmatpush1.xpose.msra.mxu0 0.0
  %387 = vmatprep.subr.mxu0 0.0
  %388 = vmatpush1.xpose.msra.mxu0 0.0
  %389 = vmatprep.subr.mxu0 0.0
  %390 = vmatpush1.xpose.msra.mxu0 0.0
  %391 = vmatprep.subr.mxu0 0.0
  %392 = vmatpush1.xpose.msra.mxu0 0.0
  %393 = vmatprep.subr.mxu0 0.0
  %394 = vmatpush1.xpose.msra.mxu0 0.0
  %395 = vmatprep.subr.mxu0 0.0
  %396 = vmatpush1.xpose.msra.mxu0 0.0
  %397 = vmatprep.subr.mxu0 0.0
  %398 = vmatpush1.xpose.msra.mxu0 0.0
  %399 = vmatprep.subr.mxu0 0.0
  %400 = vmatpush1.xpose.msra.mxu0 0.0
  %401 = vmatprep.subr.mxu0 0.0
  %402 = vmatpush1.xpose.msra.mxu0 0.0
  %403 = vmatprep.subr.mxu0 0.0
  %404 = vmatpush1.xpose.msra.mxu0 0.0
  %405 = vmatprep.subr.mxu0 0.0
  %v406 = vand.u32 %v109, 4294901760
  %v407 = vsub.f32 %v109, %v406
  %408 = vmatpush1.xpose.msra.mxu0 %v407
  %409 = vmatprep.subr.mxu0 0.0
  %410 = vmatpush2.xpose.msra.mxu0 0.0
  %411 = vmatprep.subr.mxu0 0.0
  %412 = vmatpush2.xpose.msra.mxu0 0.0
  %413 = vmatprep.subr.mxu0 0.0
  %414 = vmatpush2.xpose.msra.mxu0 0.0
  %415 = vmatprep.subr.mxu0 0.0
  %416 = vmatpush2.xpose.msra.mxu0 0.0
  %417 = vmatprep.subr.mxu0 0.0
  %418 = vmatpush2.xpose.msra.mxu0 0.0
  %419 = vmatprep.subr.mxu0 0.0
  %420 = vmatpush2.xpose.msra.mxu0 0.0
  %421 = vmatprep.subr.mxu0 0.0
  %422 = vmatpush2.xpose.msra.mxu0 0.0
  %423 = vmatprep.subr.mxu0 0.0
  %424 = vmatpush2.xpose.msra.mxu0 0.0
  %425 = vmatprep.subr.mxu0 0.0
  %426 = vmatpush2.xpose.msra.mxu0 0.0
  %427 = vmatprep.subr.mxu0 0.0
  %428 = vmatpush2.xpose.msra.mxu0 0.0
  %429 = vmatprep.subr.mxu0 0.0
  %430 = vmatpush2.xpose.msra.mxu0 0.0
  %431 = vmatprep.subr.mxu0 0.0
  %432 = vmatpush2.xpose.msra.mxu0 0.0
  %433 = vmatprep.subr.mxu0 0.0
  %434 = vmatpush2.xpose.msra.mxu0 0.0
  %435 = vmatprep.subr.mxu0 0.0
  %436 = vmatpush2.xpose.msra.mxu0 0.0
  %437 = vmatprep.subr.mxu0 0.0
  %438 = vmatpush2.xpose.msra.mxu0 0.0
  %439 = vmatprep.subr.mxu0 0.0
  %440 = vmatpush2.xpose.msra.mxu0 0.0
  %441 = vmatprep.mubr.f32.mxu0 0.0
  %v442 = vand.u32 %v85, 4294901760
  %v443 = vsub.f32 %v85, %v442
  %444 = vmatmul.mubr.f32.gmra.mxu0 %v443
  %v445 = vpop.f32.mrf.mxu0
  %v446 = vadd.f32 %v330, %v445
  %v447 = vpop.f32.mrf.mxu0
  %448 = vmatprep.mubr.f32.mxu0 0.0
  %v449 = vand.u32 %v88, 4294901760
  %v450 = vsub.f32 %v88, %v449
  %451 = vmatmul.mubr.f32.gmra.mxu0 %v450
  %v452 = vpop.f32.mrf.mxu0
  %v453 = vadd.f32 %v336, %v452
  %v454 = vpop.f32.mrf.mxu0
  %455 = vmatprep.mubr.f32.mxu0 0.0
  %v456 = vand.u32 %v91, 4294901760
  %v457 = vsub.f32 %v91, %v456
  %458 = vmatmul.mubr.f32.gmra.mxu0 %v457
  %v459 = vpop.f32.mrf.mxu0
  %v460 = vadd.f32 %v342, %v459
  %v461 = vpop.f32.mrf.mxu0
  %462 = vmatprep.mubr.f32.mxu0 0.0
  %v463 = vand.u32 %v94, 4294901760
  %v464 = vsub.f32 %v94, %v463
  %465 = vmatmul.mubr.f32.gmra.mxu0 %v464
  %v466 = vpop.f32.mrf.mxu0
  %v467 = vadd.f32 %v348, %v466
  %v468 = vpop.f32.mrf.mxu0
  %469 = vmatprep.mubr.f32.mxu0 0.0
  %v470 = vand.u32 %v97, 4294901760
  %v471 = vsub.f32 %v97, %v470
  %472 = vmatmul.mubr.f32.gmra.mxu0 %v471
  %v473 = vpop.f32.mrf.mxu0
  %v474 = vadd.f32 %v354, %v473
  %v475 = vpop.f32.mrf.mxu0
  %476 = vmatprep.mubr.f32.mxu0 0.0
  %v477 = vand.u32 %v100, 4294901760
  %v478 = vsub.f32 %v100, %v477
  %479 = vmatmul.mubr.f32.gmra.mxu0 %v478
  %v480 = vpop.f32.mrf.mxu0
  %v481 = vadd.f32 %v360, %v480
  %v482 = vpop.f32.mrf.mxu0
  %483 = vmatprep.mubr.f32.mxu0 0.0
  %v484 = vand.u32 %v103, 4294901760
  %v485 = vsub.f32 %v103, %v484
  %486 = vmatmul.mubr.f32.gmra.mxu0 %v485
  %v487 = vpop.f32.mrf.mxu0
  %v488 = vadd.f32 %v366, %v487
  %v489 = vpop.f32.mrf.mxu0
  %490 = vmatprep.mubr.f32.mxu0 0.0
  %v491 = vand.u32 %v106, 4294901760
  %v492 = vsub.f32 %v106, %v491
  %493 = vmatmul.mubr.f32.gmra.mxu0 %v492
  %v494 = vpop.f32.mrf.mxu0
  %v495 = vadd.f32 %v372, %v494
  %v496 = vpop.f32.mrf.mxu0
  %497 = vdwg.mxu0
  %498 = vmatprep.subr.mxu0 0.0
  %499 = vmatpush1.xpose.msra.mxu0 0.0
  %500 = vmatprep.subr.mxu0 0.0
  %501 = vmatpush1.xpose.msra.mxu0 0.0
  %502 = vmatprep.subr.mxu0 0.0
  %503 = vmatpush1.xpose.msra.mxu0 0.0
  %504 = vmatprep.subr.mxu0 0.0
  %505 = vmatpush1.xpose.msra.mxu0 0.0
  %506 = vmatprep.subr.mxu0 0.0
  %507 = vmatpush1.xpose.msra.mxu0 0.0
  %508 = vmatprep.subr.mxu0 0.0
  %509 = vmatpush1.xpose.msra.mxu0 0.0
  %510 = vmatprep.subr.mxu0 0.0
  %511 = vmatpush1.xpose.msra.mxu0 0.0
  %512 = vmatprep.subr.mxu0 0.0
  %513 = vmatpush1.xpose.msra.mxu0 0.0
  %514 = vmatprep.subr.mxu0 0.0
  %515 = vmatpush1.xpose.msra.mxu0 0.0
  %516 = vmatprep.subr.mxu0 0.0
  %517 = vmatpush1.xpose.msra.mxu0 0.0
  %518 = vmatprep.subr.mxu0 0.0
  %519 = vmatpush1.xpose.msra.mxu0 0.0
  %520 = vmatprep.subr.mxu0 0.0
  %521 = vmatpush1.xpose.msra.mxu0 0.0
  %522 = vmatprep.subr.mxu0 0.0
  %523 = vmatpush1.xpose.msra.mxu0 0.0
  %524 = vmatprep.subr.mxu0 0.0
  %525 = vmatpush1.xpose.msra.mxu0 0.0
  %526 = vmatprep.subr.mxu0 0.0
  %527 = vmatpush1.xpose.msra.mxu0 0.0
  %528 = vmatprep.subr.mxu0 0.0
  %v529 = vand.u32 %v109, 4294901760
  %530 = vmatpush1.xpose.msra.mxu0 %v529
  %531 = vmatprep.subr.mxu0 0.0
  %532 = vmatpush2.xpose.msra.mxu0 0.0
  %533 = vmatprep.subr.mxu0 0.0
  %534 = vmatpush2.xpose.msra.mxu0 0.0
  %535 = vmatprep.subr.mxu0 0.0
  %536 = vmatpush2.xpose.msra.mxu0 0.0
  %537 = vmatprep.subr.mxu0 0.0
  %538 = vmatpush2.xpose.msra.mxu0 0.0
  %539 = vmatprep.subr.mxu0 0.0
  %540 = vmatpush2.xpose.msra.mxu0 0.0
  %541 = vmatprep.subr.mxu0 0.0
  %542 = vmatpush2.xpose.msra.mxu0 0.0
  %543 = vmatprep.subr.mxu0 0.0
  %544 = vmatpush2.xpose.msra.mxu0 0.0
  %545 = vmatprep.subr.mxu0 0.0
  %546 = vmatpush2.xpose.msra.mxu0 0.0
  %547 = vmatprep.subr.mxu0 0.0
  %548 = vmatpush2.xpose.msra.mxu0 0.0
  %549 = vmatprep.subr.mxu0 0.0
  %550 = vmatpush2.xpose.msra.mxu0 0.0
  %551 = vmatprep.subr.mxu0 0.0
  %552 = vmatpush2.xpose.msra.mxu0 0.0
  %553 = vmatprep.subr.mxu0 0.0
  %554 = vmatpush2.xpose.msra.mxu0 0.0
  %555 = vmatprep.subr.mxu0 0.0
  %556 = vmatpush2.xpose.msra.mxu0 0.0
  %557 = vmatprep.subr.mxu0 0.0
  %558 = vmatpush2.xpose.msra.mxu0 0.0
  %559 = vmatprep.subr.mxu0 0.0
  %560 = vmatpush2.xpose.msra.mxu0 0.0
  %561 = vmatprep.subr.mxu0 0.0
  %562 = vmatpush2.xpose.msra.mxu0 0.0
  %563 = vmatprep.mubr.f32.mxu0 0.0
  %v564 = vand.u32 %v85, 4294901760
  %v565 = vsub.f32 %v85, %v564
  %v566 = vand.u32 %v565, 4294901760
  %567 = vmatmul.mubr.f32.gmra.mxu0 %v566
  %v568 = vpop.f32.mrf.mxu0
  %v569 = vadd.f32 %v446, %v568
  %v570 = vpop.f32.mrf.mxu0
  %571 = vmatprep.mubr.f32.mxu0 0.0
  %v572 = vand.u32 %v88, 4294901760
  %v573 = vsub.f32 %v88, %v572
  %v574 = vand.u32 %v573, 4294901760
  %575 = vmatmul.mubr.f32.gmra.mxu0 %v574
  %v576 = vpop.f32.mrf.mxu0
  %v577 = vadd.f32 %v453, %v576
  %v578 = vpop.f32.mrf.mxu0
  %579 = vmatprep.mubr.f32.mxu0 0.0
  %v580 = vand.u32 %v91, 4294901760
  %v581 = vsub.f32 %v91, %v580
  %v582 = vand.u32 %v581, 4294901760
  %583 = vmatmul.mubr.f32.gmra.mxu0 %v582
  %v584 = vpop.f32.mrf.mxu0
  %v585 = vadd.f32 %v460, %v584
  %v586 = vpop.f32.mrf.mxu0
  %587 = vmatprep.mubr.f32.mxu0 0.0
  %v588 = vand.u32 %v94, 4294901760
  %v589 = vsub.f32 %v94, %v588
  %v590 = vand.u32 %v589, 4294901760
  %591 = vmatmul.mubr.f32.gmra.mxu0 %v590
  %v592 = vpop.f32.mrf.mxu0
  %v593 = vadd.f32 %v467, %v592
  %v594 = vpop.f32.mrf.mxu0
  %595 = vmatprep.mubr.f32.mxu0 0.0
  %v596 = vand.u32 %v97, 4294901760
  %v597 = vsub.f32 %v97, %v596
  %v598 = vand.u32 %v597, 4294901760
  %599 = vmatmul.mubr.f32.gmra.mxu0 %v598
  %v600 = vpop.f32.mrf.mxu0
  %v601 = vadd.f32 %v474, %v600
  %v602 = vpop.f32.mrf.mxu0
  %603 = vmatprep.mubr.f32.mxu0 0.0
  %v604 = vand.u32 %v100, 4294901760
  %v605 = vsub.f32 %v100, %v604
  %v606 = vand.u32 %v605, 4294901760
  %607 = vmatmul.mubr.f32.gmra.mxu0 %v606
  %v608 = vpop.f32.mrf.mxu0
  %v609 = vadd.f32 %v481, %v608
  %v610 = vpop.f32.mrf.mxu0
  %611 = vmatprep.mubr.f32.mxu0 0.0
  %v612 = vand.u32 %v103, 4294901760
  %v613 = vsub.f32 %v103, %v612
  %v614 = vand.u32 %v613, 4294901760
  %615 = vmatmul.mubr.f32.gmra.mxu0 %v614
  %v616 = vpop.f32.mrf.mxu0
  %v617 = vadd.f32 %v488, %v616
  %v618 = vpop.f32.mrf.mxu0
  %619 = vmatprep.mubr.f32.mxu0 0.0
  %v620 = vand.u32 %v106, 4294901760
  %v621 = vsub.f32 %v106, %v620
  %v622 = vand.u32 %v621, 4294901760
  %623 = vmatmul.mubr.f32.gmra.mxu0 %v622
  %v624 = vpop.f32.mrf.mxu0
  %v625 = vadd.f32 %v495, %v624
  %v626 = vpop.f32.mrf.mxu0
  %627 = vdwg.mxu0
  %628 = vmatprep.subr.mxu0 0.0
  %629 = vmatpush1.xpose.msra.mxu0 0.0
  %630 = vmatprep.subr.mxu0 0.0
  %631 = vmatpush1.xpose.msra.mxu0 0.0
  %632 = vmatprep.subr.mxu0 0.0
  %633 = vmatpush1.xpose.msra.mxu0 0.0
  %634 = vmatprep.subr.mxu0 0.0
  %635 = vmatpush1.xpose.msra.mxu0 0.0
  %636 = vmatprep.subr.mxu0 0.0
  %637 = vmatpush1.xpose.msra.mxu0 0.0
  %638 = vmatprep.subr.mxu0 0.0
  %639 = vmatpush1.xpose.msra.mxu0 0.0
  %640 = vmatprep.subr.mxu0 0.0
  %641 = vmatpush1.xpose.msra.mxu0 0.0
  %642 = vmatprep.subr.mxu0 0.0
  %643 = vmatpush1.xpose.msra.mxu0 0.0
  %644 = vmatprep.subr.mxu0 0.0
  %645 = vmatpush1.xpose.msra.mxu0 0.0
  %646 = vmatprep.subr.mxu0 0.0
  %647 = vmatpush1.xpose.msra.mxu0 0.0
  %648 = vmatprep.subr.mxu0 0.0
  %649 = vmatpush1.xpose.msra.mxu0 0.0
  %650 = vmatprep.subr.mxu0 0.0
  %651 = vmatpush1.xpose.msra.mxu0 0.0
  %652 = vmatprep.subr.mxu0 0.0
  %653 = vmatpush1.xpose.msra.mxu0 0.0
  %654 = vmatprep.subr.mxu0 0.0
  %655 = vmatpush1.xpose.msra.mxu0 0.0
  %656 = vmatprep.subr.mxu0 0.0
  %657 = vmatpush1.xpose.msra.mxu0 0.0
  %658 = vmatprep.subr.mxu0 0.0
  %v659 = vand.u32 %v109, 4294901760
  %v660 = vsub.f32 %v109, %v659
  %v661 = vand.u32 %v660, 4294901760
  %662 = vmatpush1.xpose.msra.mxu0 %v661
  %663 = vmatprep.subr.mxu0 0.0
  %664 = vmatpush2.xpose.msra.mxu0 0.0
  %665 = vmatprep.subr.mxu0 0.0
  %666 = vmatpush2.xpose.msra.mxu0 0.0
  %667 = vmatprep.subr.mxu0 0.0
  %668 = vmatpush2.xpose.msra.mxu0 0.0
  %669 = vmatprep.subr.mxu0 0.0
  %670 = vmatpush2.xpose.msra.mxu0 0.0
  %671 = vmatprep.subr.mxu0 0.0
  %672 = vmatpush2.xpose.msra.mxu0 0.0
  %673 = vmatprep.subr.mxu0 0.0
  %674 = vmatpush2.xpose.msra.mxu0 0.0
  %675 = vmatprep.subr.mxu0 0.0
  %676 = vmatpush2.xpose.msra.mxu0 0.0
  %677 = vmatprep.subr.mxu0 0.0
  %678 = vmatpush2.xpose.msra.mxu0 0.0
  %679 = vmatprep.subr.mxu0 0.0
  %680 = vmatpush2.xpose.msra.mxu0 0.0
  %681 = vmatprep.subr.mxu0 0.0
  %682 = vmatpush2.xpose.msra.mxu0 0.0
  %683 = vmatprep.subr.mxu0 0.0
  %684 = vmatpush2.xpose.msra.mxu0 0.0
  %685 = vmatprep.subr.mxu0 0.0
  %686 = vmatpush2.xpose.msra.mxu0 0.0
  %687 = vmatprep.subr.mxu0 0.0
  %688 = vmatpush2.xpose.msra.mxu0 0.0
  %689 = vmatprep.subr.mxu0 0.0
  %690 = vmatpush2.xpose.msra.mxu0 0.0
  %691 = vmatprep.subr.mxu0 0.0
  %692 = vmatpush2.xpose.msra.mxu0 0.0
  %693 = vmatprep.subr.mxu0 0.0
  %694 = vmatpush2.xpose.msra.mxu0 0.0
  %695 = vmatprep.mubr.f32.mxu0 0.0
  %v696 = vand.u32 %v85, 4294901760
  %697 = vmatmul.mubr.f32.gmra.mxu0 %v696
  %v698 = vpop.f32.mrf.mxu0
  %v699 = vadd.f32 %v569, %v698
  %v700 = vpop.f32.mrf.mxu0
  %701 = vmatprep.mubr.f32.mxu0 0.0
  %v702 = vand.u32 %v88, 4294901760
  %703 = vmatmul.mubr.f32.gmra.mxu0 %v702
  %v704 = vpop.f32.mrf.mxu0
  %v705 = vadd.f32 %v577, %v704
  %v706 = vpop.f32.mrf.mxu0
  %707 = vmatprep.mubr.f32.mxu0 0.0
  %v708 = vand.u32 %v91, 4294901760
  %709 = vmatmul.mubr.f32.gmra.mxu0 %v708
  %v710 = vpop.f32.mrf.mxu0
  %v711 = vadd.f32 %v585, %v710
  %v712 = vpop.f32.mrf.mxu0
  %713 = vmatprep.mubr.f32.mxu0 0.0
  %v714 = vand.u32 %v94, 4294901760
  %715 = vmatmul.mubr.f32.gmra.mxu0 %v714
  %v716 = vpop.f32.mrf.mxu0
  %v717 = vadd.f32 %v593, %v716
  %v718 = vpop.f32.mrf.mxu0
  %719 = vmatprep.mubr.f32.mxu0 0.0
  %v720 = vand.u32 %v97, 4294901760
  %721 = vmatmul.mubr.f32.gmra.mxu0 %v720
  %v722 = vpop.f32.mrf.mxu0
  %v723 = vadd.f32 %v601, %v722
  %v724 = vpop.f32.mrf.mxu0
  %725 = vmatprep.mubr.f32.mxu0 0.0
  %v726 = vand.u32 %v100, 4294901760
  %727 = vmatmul.mubr.f32.gmra.mxu0 %v726
  %v728 = vpop.f32.mrf.mxu0
  %v729 = vadd.f32 %v609, %v728
  %v730 = vpop.f32.mrf.mxu0
  %731 = vmatprep.mubr.f32.mxu0 0.0
  %v732 = vand.u32 %v103, 4294901760
  %733 = vmatmul.mubr.f32.gmra.mxu0 %v732
  %v734 = vpop.f32.mrf.mxu0
  %v735 = vadd.f32 %v617, %v734
  %v736 = vpop.f32.mrf.mxu0
  %737 = vmatprep.mubr.f32.mxu0 0.0
  %v738 = vand.u32 %v106, 4294901760
  %739 = vmatmul.mubr.f32.gmra.mxu0 %v738
  %v740 = vpop.f32.mrf.mxu0
  %v741 = vadd.f32 %v625, %v740
  %v742 = vpop.f32.mrf.mxu0
  %743 = vdwg.mxu0
  %744 = vmatprep.subr.mxu0 0.0
  %745 = vmatpush1.xpose.msra.mxu0 0.0
  %746 = vmatprep.subr.mxu0 0.0
  %747 = vmatpush1.xpose.msra.mxu0 0.0
  %748 = vmatprep.subr.mxu0 0.0
  %749 = vmatpush1.xpose.msra.mxu0 0.0
  %750 = vmatprep.subr.mxu0 0.0
  %751 = vmatpush1.xpose.msra.mxu0 0.0
  %752 = vmatprep.subr.mxu0 0.0
  %753 = vmatpush1.xpose.msra.mxu0 0.0
  %754 = vmatprep.subr.mxu0 0.0
  %755 = vmatpush1.xpose.msra.mxu0 0.0
  %756 = vmatprep.subr.mxu0 0.0
  %757 = vmatpush1.xpose.msra.mxu0 0.0
  %758 = vmatprep.subr.mxu0 0.0
  %759 = vmatpush1.xpose.msra.mxu0 0.0
  %760 = vmatprep.subr.mxu0 0.0
  %761 = vmatpush1.xpose.msra.mxu0 0.0
  %762 = vmatprep.subr.mxu0 0.0
  %763 = vmatpush1.xpose.msra.mxu0 0.0
  %764 = vmatprep.subr.mxu0 0.0
  %765 = vmatpush1.xpose.msra.mxu0 0.0
  %766 = vmatprep.subr.mxu0 0.0
  %767 = vmatpush1.xpose.msra.mxu0 0.0
  %768 = vmatprep.subr.mxu0 0.0
  %769 = vmatpush1.xpose.msra.mxu0 0.0
  %770 = vmatprep.subr.mxu0 0.0
  %771 = vmatpush1.xpose.msra.mxu0 0.0
  %772 = vmatprep.subr.mxu0 0.0
  %773 = vmatpush1.xpose.msra.mxu0 0.0
  %774 = vmatprep.subr.mxu0 0.0
  %v775 = vand.u32 %v109, 4294901760
  %776 = vmatpush1.xpose.msra.mxu0 %v775
  %777 = vmatprep.subr.mxu0 0.0
  %778 = vmatpush2.xpose.msra.mxu0 0.0
  %779 = vmatprep.subr.mxu0 0.0
  %780 = vmatpush2.xpose.msra.mxu0 0.0
  %781 = vmatprep.subr.mxu0 0.0
  %782 = vmatpush2.xpose.msra.mxu0 0.0
  %783 = vmatprep.subr.mxu0 0.0
  %784 = vmatpush2.xpose.msra.mxu0 0.0
  %785 = vmatprep.subr.mxu0 0.0
  %786 = vmatpush2.xpose.msra.mxu0 0.0
  %787 = vmatprep.subr.mxu0 0.0
  %788 = vmatpush2.xpose.msra.mxu0 0.0
  %789 = vmatprep.subr.mxu0 0.0
  %790 = vmatpush2.xpose.msra.mxu0 0.0
  %791 = vmatprep.subr.mxu0 0.0
  %792 = vmatpush2.xpose.msra.mxu0 0.0
  %793 = vmatprep.subr.mxu0 0.0
  %794 = vmatpush2.xpose.msra.mxu0 0.0
  %795 = vmatprep.subr.mxu0 0.0
  %796 = vmatpush2.xpose.msra.mxu0 0.0
  %797 = vmatprep.subr.mxu0 0.0
  %798 = vmatpush2.xpose.msra.mxu0 0.0
  %799 = vmatprep.subr.mxu0 0.0
  %800 = vmatpush2.xpose.msra.mxu0 0.0
  %801 = vmatprep.subr.mxu0 0.0
  %802 = vmatpush2.xpose.msra.mxu0 0.0
  %803 = vmatprep.subr.mxu0 0.0
  %804 = vmatpush2.xpose.msra.mxu0 0.0
  %805 = vmatprep.subr.mxu0 0.0
  %806 = vmatpush2.xpose.msra.mxu0 0.0
  %807 = vmatprep.subr.mxu0 0.0
  %808 = vmatpush2.xpose.msra.mxu0 0.0
  %809 = vmatprep.mubr.f32.mxu0 0.0
  %v810 = vand.u32 %v85, 4294901760
  %811 = vmatmul.mubr.f32.gmra.mxu0 %v810
  %v812 = vpop.f32.mrf.mxu0
  %v813 = vadd.f32 %v699, %v812
  %v814 = vpop.f32.mrf.mxu0
  %815 = vmatprep.mubr.f32.mxu0 0.0
  %v816 = vand.u32 %v88, 4294901760
  %817 = vmatmul.mubr.f32.gmra.mxu0 %v816
  %v818 = vpop.f32.mrf.mxu0
  %v819 = vadd.f32 %v705, %v818
  %v820 = vpop.f32.mrf.mxu0
  %821 = vmatprep.mubr.f32.mxu0 0.0
  %v822 = vand.u32 %v91, 4294901760
  %823 = vmatmul.mubr.f32.gmra.mxu0 %v822
  %v824 = vpop.f32.mrf.mxu0
  %v825 = vadd.f32 %v711, %v824
  %v826 = vpop.f32.mrf.mxu0
  %827 = vmatprep.mubr.f32.mxu0 0.0
  %v828 = vand.u32 %v94, 4294901760
  %829 = vmatmul.mubr.f32.gmra.mxu0 %v828
  %v830 = vpop.f32.mrf.mxu0
  %v831 = vadd.f32 %v717, %v830
  %v832 = vpop.f32.mrf.mxu0
  %833 = vmatprep.mubr.f32.mxu0 0.0
  %v834 = vand.u32 %v97, 4294901760
  %835 = vmatmul.mubr.f32.gmra.mxu0 %v834
  %v836 = vpop.f32.mrf.mxu0
  %v837 = vadd.f32 %v723, %v836
  %v838 = vpop.f32.mrf.mxu0
  %839 = vmatprep.mubr.f32.mxu0 0.0
  %v840 = vand.u32 %v100, 4294901760
  %841 = vmatmul.mubr.f32.gmra.mxu0 %v840
  %v842 = vpop.f32.mrf.mxu0
  %v843 = vadd.f32 %v729, %v842
  %v844 = vpop.f32.mrf.mxu0
  %845 = vmatprep.mubr.f32.mxu0 0.0
  %v846 = vand.u32 %v103, 4294901760
  %847 = vmatmul.mubr.f32.gmra.mxu0 %v846
  %v848 = vpop.f32.mrf.mxu0
  %v849 = vadd.f32 %v735, %v848
  %v850 = vpop.f32.mrf.mxu0
  %851 = vmatprep.mubr.f32.mxu0 0.0
  %v852 = vand.u32 %v106, 4294901760
  %853 = vmatmul.mubr.f32.gmra.mxu0 %v852
  %v854 = vpop.f32.mrf.mxu0
  %v855 = vadd.f32 %v741, %v854
  %v856 = vpop.f32.mrf.mxu0
  %857 = vdwg.mxu0
  %v858 = vmax.f32 %v813, 0.0
  %v859 = vmax.f32 %v819, 0.0
  %v860 = vmax.f32 %v825, 0.0
  %v861 = vmax.f32 %v831, 0.0
  %v862 = vmax.f32 %v837, 0.0
  %v863 = vmax.f32 %v843, 0.0
  %v864 = vmax.f32 %v849, 0.0
  %v865 = vmax.f32 %v855, 0.0
  %v866 = vld [vmem:[%s3] sm:$0xff]
  %v867 = vld [vmem:[%s3 + $0x8] sm:$0xff]
  %v868 = vld [vmem:[%s3 + $0x10] sm:$0xff]
  %v869 = vld [vmem:[%s3 + $0x18] sm:$0xff]
  %v870 = vld [vmem:[%s4] sm:$0xff]
  %v871 = vld [vmem:[%s4 + $0x8] sm:$0xff]
  %v872 = vld [vmem:[%s4 + $0x10] sm:$0xff]
  %v873 = vld [vmem:[%s4 + $0x18] sm:$0xff]
  %875 = vset.pattern.permute.xlu0 0
  %876 = vperm.xlu0 %875, %v870
  %v877 = vpop.permute.xlu0 %876
  %880 = vset.pattern.permute.xlu0 0
  %881 = vperm.xlu0 %880, %v871
  %v882 = vpop.permute.xlu0 %881
  %885 = vset.pattern.permute.xlu0 0
  %886 = vperm.xlu0 %885, %v872
  %v887 = vpop.permute.xlu0 %886
  %890 = vset.pattern.permute.xlu0 0
  %891 = vperm.xlu0 %890, %v873
  %v892 = vpop.permute.xlu0 %891
  %vm894 = vcmask 523264
  %v896 = vsel %vm894, %v866, 0
  %v899 = vsel %vm894, %v867, 0
  %v902 = vsel %vm894, %v868, 0
  %v905 = vsel %vm894, %v869, 0
  %907 = vmatprep.subr.mxu0 0.0
  %908 = vmatpush1.msra.mxu0 0.0
  %909 = vmatprep.subr.mxu0 0.0
  %910 = vmatpush1.msra.mxu0 0.0
  %911 = vmatprep.subr.mxu0 0.0
  %912 = vmatpush1.msra.mxu0 0.0
  %913 = vmatprep.subr.mxu0 0.0
  %914 = vmatpush1.msra.mxu0 0.0
  %915 = vmatprep.subr.mxu0 0.0
  %916 = vmatpush1.msra.mxu0 0.0
  %917 = vmatprep.subr.mxu0 0.0
  %918 = vmatpush1.msra.mxu0 0.0
  %919 = vmatprep.subr.mxu0 0.0
  %920 = vmatpush1.msra.mxu0 0.0
  %921 = vmatprep.subr.mxu0 0.0
  %922 = vmatpush1.msra.mxu0 0.0
  %923 = vmatprep.subr.mxu0 0.0
  %v924 = vand.u32 %v865, 4294901760
  %925 = vmatpush1.msra.mxu0 %v924
  %926 = vmatprep.subr.mxu0 0.0
  %v927 = vand.u32 %v864, 4294901760
  %928 = vmatpush1.msra.mxu0 %v927
  %929 = vmatprep.subr.mxu0 0.0
  %v930 = vand.u32 %v863, 4294901760
  %931 = vmatpush1.msra.mxu0 %v930
  %932 = vmatprep.subr.mxu0 0.0
  %v933 = vand.u32 %v862, 4294901760
  %934 = vmatpush1.msra.mxu0 %v933
  %935 = vmatprep.subr.mxu0 0.0
  %v936 = vand.u32 %v861, 4294901760
  %937 = vmatpush1.msra.mxu0 %v936
  %938 = vmatprep.subr.mxu0 0.0
  %v939 = vand.u32 %v860, 4294901760
  %940 = vmatpush1.msra.mxu0 %v939
  %941 = vmatprep.subr.mxu0 0.0
  %v942 = vand.u32 %v859, 4294901760
  %943 = vmatpush1.msra.mxu0 %v942
  %944 = vmatprep.subr.mxu0 0.0
  %v945 = vand.u32 %v858, 4294901760
  %946 = vmatpush1.msra.mxu0 %v945
  %947 = vmatprep.subr.mxu0 0.0
  %948 = vmatpush2.msra.mxu0 0.0
  %949 = vmatprep.subr.mxu0 0.0
  %950 = vmatpush2.msra.mxu0 0.0
  %951 = vmatprep.subr.mxu0 0.0
  %952 = vmatpush2.msra.mxu0 0.0
  %953 = vmatprep.subr.mxu0 0.0
  %954 = vmatpush2.msra.mxu0 0.0
  %955 = vmatprep.subr.mxu0 0.0
  %956 = vmatpush2.msra.mxu0 0.0
  %957 = vmatprep.subr.mxu0 0.0
  %958 = vmatpush2.msra.mxu0 0.0
  %959 = vmatprep.subr.mxu0 0.0
  %960 = vmatpush2.msra.mxu0 0.0
  %961 = vmatprep.subr.mxu0 0.0
  %962 = vmatpush2.msra.mxu0 0.0
  %963 = vmatprep.subr.mxu0 0.0
  %964 = vmatpush2.msra.mxu0 0.0
  %965 = vmatprep.subr.mxu0 0.0
  %966 = vmatpush2.msra.mxu0 0.0
  %967 = vmatprep.subr.mxu0 0.0
  %968 = vmatpush2.msra.mxu0 0.0
  %969 = vmatprep.subr.mxu0 0.0
  %970 = vmatpush2.msra.mxu0 0.0
  %971 = vmatprep.subr.mxu0 0.0
  %972 = vmatpush2.msra.mxu0 0.0
  %973 = vmatprep.subr.mxu0 0.0
  %974 = vmatpush2.msra.mxu0 0.0
  %975 = vmatprep.subr.mxu0 0.0
  %976 = vmatpush2.msra.mxu0 0.0
  %977 = vmatprep.subr.mxu0 0.0
  %978 = vmatpush2.msra.mxu0 0.0
  %979 = vmatprep.mubr.f32.mxu0 0.0
  %v980 = vand.u32 %v896, 4294901760
  %v981 = vsub.f32 %v896, %v980
  %v982 = vand.u32 %v981, 4294901760
  %v983 = vsub.f32 %v981, %v982
  %v984 = vand.u32 %v983, 4294901760
  %985 = vmatmul.mubr.f32.gmra.mxu0 %v984
  %v986 = vpop.f32.mrf.mxu0
  %v987 = vadd.f32 %v877, %v986
  %v988 = vpop.f32.mrf.mxu0
  %989 = vmatprep.mubr.f32.mxu0 0.0
  %v990 = vand.u32 %v899, 4294901760
  %v991 = vsub.f32 %v899, %v990
  %v992 = vand.u32 %v991, 4294901760
  %v993 = vsub.f32 %v991, %v992
  %v994 = vand.u32 %v993, 4294901760
  %995 = vmatmul.mubr.f32.gmra.mxu0 %v994
  %v996 = vpop.f32.mrf.mxu0
  %v997 = vadd.f32 %v882, %v996
  %v998 = vpop.f32.mrf.mxu0
  %999 = vmatprep.mubr.f32.mxu0 0.0
  %v1000 = vand.u32 %v902, 4294901760
  %v1001 = vsub.f32 %v902, %v1000
  %v1002 = vand.u32 %v1001, 4294901760
  %v1003 = vsub.f32 %v1001, %v1002
  %v1004 = vand.u32 %v1003, 4294901760
  %1005 = vmatmul.mubr.f32.gmra.mxu0 %v1004
  %v1006 = vpop.f32.mrf.mxu0
  %v1007 = vadd.f32 %v887, %v1006
  %v1008 = vpop.f32.mrf.mxu0
  %1009 = vmatprep.mubr.f32.mxu0 0.0
  %v1010 = vand.u32 %v905, 4294901760
  %v1011 = vsub.f32 %v905, %v1010
  %v1012 = vand.u32 %v1011, 4294901760
  %v1013 = vsub.f32 %v1011, %v1012
  %v1014 = vand.u32 %v1013, 4294901760
  %1015 = vmatmul.mubr.f32.gmra.mxu0 %v1014
  %v1016 = vpop.f32.mrf.mxu0
  %v1017 = vadd.f32 %v892, %v1016
  %v1018 = vpop.f32.mrf.mxu0
  %1019 = vdwg.mxu0
  %1020 = vmatprep.subr.mxu0 0.0
  %1021 = vmatpush1.msra.mxu0 0.0
  %1022 = vmatprep.subr.mxu0 0.0
  %1023 = vmatpush1.msra.mxu0 0.0
  %1024 = vmatprep.subr.mxu0 0.0
  %1025 = vmatpush1.msra.mxu0 0.0
  %1026 = vmatprep.subr.mxu0 0.0
  %1027 = vmatpush1.msra.mxu0 0.0
  %1028 = vmatprep.subr.mxu0 0.0
  %1029 = vmatpush1.msra.mxu0 0.0
  %1030 = vmatprep.subr.mxu0 0.0
  %1031 = vmatpush1.msra.mxu0 0.0
  %1032 = vmatprep.subr.mxu0 0.0
  %1033 = vmatpush1.msra.mxu0 0.0
  %1034 = vmatprep.subr.mxu0 0.0
  %1035 = vmatpush1.msra.mxu0 0.0
  %1036 = vmatprep.subr.mxu0 0.0
  %v1037 = vand.u32 %v865, 4294901760
  %v1038 = vsub.f32 %v865, %v1037
  %v1039 = vand.u32 %v1038, 4294901760
  %v1040 = vsub.f32 %v1038, %v1039
  %v1041 = vand.u32 %v1040, 4294901760
  %1042 = vmatpush1.msra.mxu0 %v1041
  %1043 = vmatprep.subr.mxu0 0.0
  %v1044 = vand.u32 %v864, 4294901760
  %v1045 = vsub.f32 %v864, %v1044
  %v1046 = vand.u32 %v1045, 4294901760
  %v1047 = vsub.f32 %v1045, %v1046
  %v1048 = vand.u32 %v1047, 4294901760
  %1049 = vmatpush1.msra.mxu0 %v1048
  %1050 = vmatprep.subr.mxu0 0.0
  %v1051 = vand.u32 %v863, 4294901760
  %v1052 = vsub.f32 %v863, %v1051
  %v1053 = vand.u32 %v1052, 4294901760
  %v1054 = vsub.f32 %v1052, %v1053
  %v1055 = vand.u32 %v1054, 4294901760
  %1056 = vmatpush1.msra.mxu0 %v1055
  %1057 = vmatprep.subr.mxu0 0.0
  %v1058 = vand.u32 %v862, 4294901760
  %v1059 = vsub.f32 %v862, %v1058
  %v1060 = vand.u32 %v1059, 4294901760
  %v1061 = vsub.f32 %v1059, %v1060
  %v1062 = vand.u32 %v1061, 4294901760
  %1063 = vmatpush1.msra.mxu0 %v1062
  %1064 = vmatprep.subr.mxu0 0.0
  %v1065 = vand.u32 %v861, 4294901760
  %v1066 = vsub.f32 %v861, %v1065
  %v1067 = vand.u32 %v1066, 4294901760
  %v1068 = vsub.f32 %v1066, %v1067
  %v1069 = vand.u32 %v1068, 4294901760
  %1070 = vmatpush1.msra.mxu0 %v1069
  %1071 = vmatprep.subr.mxu0 0.0
  %v1072 = vand.u32 %v860, 4294901760
  %v1073 = vsub.f32 %v860, %v1072
  %v1074 = vand.u32 %v1073, 4294901760
  %v1075 = vsub.f32 %v1073, %v1074
  %v1076 = vand.u32 %v1075, 4294901760
  %1077 = vmatpush1.msra.mxu0 %v1076
  %1078 = vmatprep.subr.mxu0 0.0
  %v1079 = vand.u32 %v859, 4294901760
  %v1080 = vsub.f32 %v859, %v1079
  %v1081 = vand.u32 %v1080, 4294901760
  %v1082 = vsub.f32 %v1080, %v1081
  %v1083 = vand.u32 %v1082, 4294901760
  %1084 = vmatpush1.msra.mxu0 %v1083
  %1085 = vmatprep.subr.mxu0 0.0
  %v1086 = vand.u32 %v858, 4294901760
  %v1087 = vsub.f32 %v858, %v1086
  %v1088 = vand.u32 %v1087, 4294901760
  %v1089 = vsub.f32 %v1087, %v1088
  %v1090 = vand.u32 %v1089, 4294901760
  %1091 = vmatpush1.msra.mxu0 %v1090
  %1092 = vmatprep.subr.mxu0 0.0
  %1093 = vmatpush2.msra.mxu0 0.0
  %1094 = vmatprep.subr.mxu0 0.0
  %1095 = vmatpush2.msra.mxu0 0.0
  %1096 = vmatprep.subr.mxu0 0.0
  %1097 = vmatpush2.msra.mxu0 0.0
  %1098 = vmatprep.subr.mxu0 0.0
  %1099 = vmatpush2.msra.mxu0 0.0
  %1100 = vmatprep.subr.mxu0 0.0
  %1101 = vmatpush2.msra.mxu0 0.0
  %1102 = vmatprep.subr.mxu0 0.0
  %1103 = vmatpush2.msra.mxu0 0.0
  %1104 = vmatprep.subr.mxu0 0.0
  %1105 = vmatpush2.msra.mxu0 0.0
  %1106 = vmatprep.subr.mxu0 0.0
  %1107 = vmatpush2.msra.mxu0 0.0
  %1108 = vmatprep.subr.mxu0 0.0
  %1109 = vmatpush2.msra.mxu0 0.0
  %1110 = vmatprep.subr.mxu0 0.0
  %1111 = vmatpush2.msra.mxu0 0.0
  %1112 = vmatprep.subr.mxu0 0.0
  %1113 = vmatpush2.msra.mxu0 0.0
  %1114 = vmatprep.subr.mxu0 0.0
  %1115 = vmatpush2.msra.mxu0 0.0
  %1116 = vmatprep.subr.mxu0 0.0
  %1117 = vmatpush2.msra.mxu0 0.0
  %1118 = vmatprep.subr.mxu0 0.0
  %1119 = vmatpush2.msra.mxu0 0.0
  %1120 = vmatprep.subr.mxu0 0.0
  %1121 = vmatpush2.msra.mxu0 0.0
  %1122 = vmatprep.subr.mxu0 0.0
  %1123 = vmatpush2.msra.mxu0 0.0
  %1124 = vmatprep.mubr.f32.mxu0 0.0
  %v1125 = vand.u32 %v896, 4294901760
  %1126 = vmatmul.mubr.f32.gmra.mxu0 %v1125
  %v1127 = vpop.f32.mrf.mxu0
  %v1128 = vadd.f32 %v987, %v1127
  %v1129 = vpop.f32.mrf.mxu0
  %1130 = vmatprep.mubr.f32.mxu0 0.0
  %v1131 = vand.u32 %v899, 4294901760
  %1132 = vmatmul.mubr.f32.gmra.mxu0 %v1131
  %v1133 = vpop.f32.mrf.mxu0
  %v1134 = vadd.f32 %v997, %v1133
  %v1135 = vpop.f32.mrf.mxu0
  %1136 = vmatprep.mubr.f32.mxu0 0.0
  %v1137 = vand.u32 %v902, 4294901760
  %1138 = vmatmul.mubr.f32.gmra.mxu0 %v1137
  %v1139 = vpop.f32.mrf.mxu0
  %v1140 = vadd.f32 %v1007, %v1139
  %v1141 = vpop.f32.mrf.mxu0
  %1142 = vmatprep.mubr.f32.mxu0 0.0
  %v1143 = vand.u32 %v905, 4294901760
  %1144 = vmatmul.mubr.f32.gmra.mxu0 %v1143
  %v1145 = vpop.f32.mrf.mxu0
  %v1146 = vadd.f32 %v1017, %v1145
  %v1147 = vpop.f32.mrf.mxu0
  %1148 = vdwg.mxu0
  %1149 = vmatprep.subr.mxu0 0.0
  %1150 = vmatpush1.msra.mxu0 0.0
  %1151 = vmatprep.subr.mxu0 0.0
  %1152 = vmatpush1.msra.mxu0 0.0
  %1153 = vmatprep.subr.mxu0 0.0
  %1154 = vmatpush1.msra.mxu0 0.0
  %1155 = vmatprep.subr.mxu0 0.0
  %1156 = vmatpush1.msra.mxu0 0.0
  %1157 = vmatprep.subr.mxu0 0.0
  %1158 = vmatpush1.msra.mxu0 0.0
  %1159 = vmatprep.subr.mxu0 0.0
  %1160 = vmatpush1.msra.mxu0 0.0
  %1161 = vmatprep.subr.mxu0 0.0
  %1162 = vmatpush1.msra.mxu0 0.0
  %1163 = vmatprep.subr.mxu0 0.0
  %1164 = vmatpush1.msra.mxu0 0.0
  %1165 = vmatprep.subr.mxu0 0.0
  %v1166 = vand.u32 %v865, 4294901760
  %v1167 = vsub.f32 %v865, %v1166
  %1168 = vmatpush1.msra.mxu0 %v1167
  %1169 = vmatprep.subr.mxu0 0.0
  %v1170 = vand.u32 %v864, 4294901760
  %v1171 = vsub.f32 %v864, %v1170
  %1172 = vmatpush1.msra.mxu0 %v1171
  %1173 = vmatprep.subr.mxu0 0.0
  %v1174 = vand.u32 %v863, 4294901760
  %v1175 = vsub.f32 %v863, %v1174
  %1176 = vmatpush1.msra.mxu0 %v1175
  %1177 = vmatprep.subr.mxu0 0.0
  %v1178 = vand.u32 %v862, 4294901760
  %v1179 = vsub.f32 %v862, %v1178
  %1180 = vmatpush1.msra.mxu0 %v1179
  %1181 = vmatprep.subr.mxu0 0.0
  %v1182 = vand.u32 %v861, 4294901760
  %v1183 = vsub.f32 %v861, %v1182
  %1184 = vmatpush1.msra.mxu0 %v1183
  %1185 = vmatprep.subr.mxu0 0.0
  %v1186 = vand.u32 %v860, 4294901760
  %v1187 = vsub.f32 %v860, %v1186
  %1188 = vmatpush1.msra.mxu0 %v1187
  %1189 = vmatprep.subr.mxu0 0.0
  %v1190 = vand.u32 %v859, 4294901760
  %v1191 = vsub.f32 %v859, %v1190
  %1192 = vmatpush1.msra.mxu0 %v1191
  %1193 = vmatprep.subr.mxu0 0.0
  %v1194 = vand.u32 %v858, 4294901760
  %v1195 = vsub.f32 %v858, %v1194
  %1196 = vmatpush1.msra.mxu0 %v1195
  %1197 = vmatprep.subr.mxu0 0.0
  %1198 = vmatpush2.msra.mxu0 0.0
  %1199 = vmatprep.subr.mxu0 0.0
  %1200 = vmatpush2.msra.mxu0 0.0
  %1201 = vmatprep.subr.mxu0 0.0
  %1202 = vmatpush2.msra.mxu0 0.0
  %1203 = vmatprep.subr.mxu0 0.0
  %1204 = vmatpush2.msra.mxu0 0.0
  %1205 = vmatprep.subr.mxu0 0.0
  %1206 = vmatpush2.msra.mxu0 0.0
  %1207 = vmatprep.subr.mxu0 0.0
  %1208 = vmatpush2.msra.mxu0 0.0
  %1209 = vmatprep.subr.mxu0 0.0
  %1210 = vmatpush2.msra.mxu0 0.0
  %1211 = vmatprep.subr.mxu0 0.0
  %1212 = vmatpush2.msra.mxu0 0.0
  %1213 = vmatprep.subr.mxu0 0.0
  %1214 = vmatpush2.msra.mxu0 0.0
  %1215 = vmatprep.subr.mxu0 0.0
  %1216 = vmatpush2.msra.mxu0 0.0
  %1217 = vmatprep.subr.mxu0 0.0
  %1218 = vmatpush2.msra.mxu0 0.0
  %1219 = vmatprep.subr.mxu0 0.0
  %1220 = vmatpush2.msra.mxu0 0.0
  %1221 = vmatprep.subr.mxu0 0.0
  %1222 = vmatpush2.msra.mxu0 0.0
  %1223 = vmatprep.subr.mxu0 0.0
  %1224 = vmatpush2.msra.mxu0 0.0
  %1225 = vmatprep.subr.mxu0 0.0
  %1226 = vmatpush2.msra.mxu0 0.0
  %1227 = vmatprep.subr.mxu0 0.0
  %1228 = vmatpush2.msra.mxu0 0.0
  %1229 = vmatprep.mubr.f32.mxu0 0.0
  %v1230 = vand.u32 %v896, 4294901760
  %v1231 = vsub.f32 %v896, %v1230
  %1232 = vmatmul.mubr.f32.gmra.mxu0 %v1231
  %v1233 = vpop.f32.mrf.mxu0
  %v1234 = vadd.f32 %v1128, %v1233
  %v1235 = vpop.f32.mrf.mxu0
  %1236 = vmatprep.mubr.f32.mxu0 0.0
  %v1237 = vand.u32 %v899, 4294901760
  %v1238 = vsub.f32 %v899, %v1237
  %1239 = vmatmul.mubr.f32.gmra.mxu0 %v1238
  %v1240 = vpop.f32.mrf.mxu0
  %v1241 = vadd.f32 %v1134, %v1240
  %v1242 = vpop.f32.mrf.mxu0
  %1243 = vmatprep.mubr.f32.mxu0 0.0
  %v1244 = vand.u32 %v902, 4294901760
  %v1245 = vsub.f32 %v902, %v1244
  %1246 = vmatmul.mubr.f32.gmra.mxu0 %v1245
  %v1247 = vpop.f32.mrf.mxu0
  %v1248 = vadd.f32 %v1140, %v1247
  %v1249 = vpop.f32.mrf.mxu0
  %1250 = vmatprep.mubr.f32.mxu0 0.0
  %v1251 = vand.u32 %v905, 4294901760
  %v1252 = vsub.f32 %v905, %v1251
  %1253 = vmatmul.mubr.f32.gmra.mxu0 %v1252
  %v1254 = vpop.f32.mrf.mxu0
  %v1255 = vadd.f32 %v1146, %v1254
  %v1256 = vpop.f32.mrf.mxu0
  %1257 = vdwg.mxu0
  %1258 = vmatprep.subr.mxu0 0.0
  %1259 = vmatpush1.msra.mxu0 0.0
  %1260 = vmatprep.subr.mxu0 0.0
  %1261 = vmatpush1.msra.mxu0 0.0
  %1262 = vmatprep.subr.mxu0 0.0
  %1263 = vmatpush1.msra.mxu0 0.0
  %1264 = vmatprep.subr.mxu0 0.0
  %1265 = vmatpush1.msra.mxu0 0.0
  %1266 = vmatprep.subr.mxu0 0.0
  %1267 = vmatpush1.msra.mxu0 0.0
  %1268 = vmatprep.subr.mxu0 0.0
  %1269 = vmatpush1.msra.mxu0 0.0
  %1270 = vmatprep.subr.mxu0 0.0
  %1271 = vmatpush1.msra.mxu0 0.0
  %1272 = vmatprep.subr.mxu0 0.0
  %1273 = vmatpush1.msra.mxu0 0.0
  %1274 = vmatprep.subr.mxu0 0.0
  %v1275 = vand.u32 %v865, 4294901760
  %1276 = vmatpush1.msra.mxu0 %v1275
  %1277 = vmatprep.subr.mxu0 0.0
  %v1278 = vand.u32 %v864, 4294901760
  %1279 = vmatpush1.msra.mxu0 %v1278
  %1280 = vmatprep.subr.mxu0 0.0
  %v1281 = vand.u32 %v863, 4294901760
  %1282 = vmatpush1.msra.mxu0 %v1281
  %1283 = vmatprep.subr.mxu0 0.0
  %v1284 = vand.u32 %v862, 4294901760
  %1285 = vmatpush1.msra.mxu0 %v1284
  %1286 = vmatprep.subr.mxu0 0.0
  %v1287 = vand.u32 %v861, 4294901760
  %1288 = vmatpush1.msra.mxu0 %v1287
  %1289 = vmatprep.subr.mxu0 0.0
  %v1290 = vand.u32 %v860, 4294901760
  %1291 = vmatpush1.msra.mxu0 %v1290
  %1292 = vmatprep.subr.mxu0 0.0
  %v1293 = vand.u32 %v859, 4294901760
  %1294 = vmatpush1.msra.mxu0 %v1293
  %1295 = vmatprep.subr.mxu0 0.0
  %v1296 = vand.u32 %v858, 4294901760
  %1297 = vmatpush1.msra.mxu0 %v1296
  %1298 = vmatprep.subr.mxu0 0.0
  %1299 = vmatpush2.msra.mxu0 0.0
  %1300 = vmatprep.subr.mxu0 0.0
  %1301 = vmatpush2.msra.mxu0 0.0
  %1302 = vmatprep.subr.mxu0 0.0
  %1303 = vmatpush2.msra.mxu0 0.0
  %1304 = vmatprep.subr.mxu0 0.0
  %1305 = vmatpush2.msra.mxu0 0.0
  %1306 = vmatprep.subr.mxu0 0.0
  %1307 = vmatpush2.msra.mxu0 0.0
  %1308 = vmatprep.subr.mxu0 0.0
  %1309 = vmatpush2.msra.mxu0 0.0
  %1310 = vmatprep.subr.mxu0 0.0
  %1311 = vmatpush2.msra.mxu0 0.0
  %1312 = vmatprep.subr.mxu0 0.0
  %1313 = vmatpush2.msra.mxu0 0.0
  %1314 = vmatprep.subr.mxu0 0.0
  %1315 = vmatpush2.msra.mxu0 0.0
  %1316 = vmatprep.subr.mxu0 0.0
  %1317 = vmatpush2.msra.mxu0 0.0
  %1318 = vmatprep.subr.mxu0 0.0
  %1319 = vmatpush2.msra.mxu0 0.0
  %1320 = vmatprep.subr.mxu0 0.0
  %1321 = vmatpush2.msra.mxu0 0.0
  %1322 = vmatprep.subr.mxu0 0.0
  %1323 = vmatpush2.msra.mxu0 0.0
  %1324 = vmatprep.subr.mxu0 0.0
  %1325 = vmatpush2.msra.mxu0 0.0
  %1326 = vmatprep.subr.mxu0 0.0
  %1327 = vmatpush2.msra.mxu0 0.0
  %1328 = vmatprep.subr.mxu0 0.0
  %1329 = vmatpush2.msra.mxu0 0.0
  %1330 = vmatprep.mubr.f32.mxu0 0.0
  %v1331 = vand.u32 %v896, 4294901760
  %v1332 = vsub.f32 %v896, %v1331
  %v1333 = vand.u32 %v1332, 4294901760
  %1334 = vmatmul.mubr.f32.gmra.mxu0 %v1333
  %v1335 = vpop.f32.mrf.mxu0
  %v1336 = vadd.f32 %v1234, %v1335
  %v1337 = vpop.f32.mrf.mxu0
  %1338 = vmatprep.mubr.f32.mxu0 0.0
  %v1339 = vand.u32 %v899, 4294901760
  %v1340 = vsub.f32 %v899, %v1339
  %v1341 = vand.u32 %v1340, 4294901760
  %1342 = vmatmul.mubr.f32.gmra.mxu0 %v1341
  %v1343 = vpop.f32.mrf.mxu0
  %v1344 = vadd.f32 %v1241, %v1343
  %v1345 = vpop.f32.mrf.mxu0
  %1346 = vmatprep.mubr.f32.mxu0 0.0
  %v1347 = vand.u32 %v902, 4294901760
  %v1348 = vsub.f32 %v902, %v1347
  %v1349 = vand.u32 %v1348, 4294901760
  %1350 = vmatmul.mubr.f32.gmra.mxu0 %v1349
  %v1351 = vpop.f32.mrf.mxu0
  %v1352 = vadd.f32 %v1248, %v1351
  %v1353 = vpop.f32.mrf.mxu0
  %1354 = vmatprep.mubr.f32.mxu0 0.0
  %v1355 = vand.u32 %v905, 4294901760
  %v1356 = vsub.f32 %v905, %v1355
  %v1357 = vand.u32 %v1356, 4294901760
  %1358 = vmatmul.mubr.f32.gmra.mxu0 %v1357
  %v1359 = vpop.f32.mrf.mxu0
  %v1360 = vadd.f32 %v1255, %v1359
  %v1361 = vpop.f32.mrf.mxu0
  %1362 = vdwg.mxu0
  %1363 = vmatprep.subr.mxu0 0.0
  %1364 = vmatpush1.msra.mxu0 0.0
  %1365 = vmatprep.subr.mxu0 0.0
  %1366 = vmatpush1.msra.mxu0 0.0
  %1367 = vmatprep.subr.mxu0 0.0
  %1368 = vmatpush1.msra.mxu0 0.0
  %1369 = vmatprep.subr.mxu0 0.0
  %1370 = vmatpush1.msra.mxu0 0.0
  %1371 = vmatprep.subr.mxu0 0.0
  %1372 = vmatpush1.msra.mxu0 0.0
  %1373 = vmatprep.subr.mxu0 0.0
  %1374 = vmatpush1.msra.mxu0 0.0
  %1375 = vmatprep.subr.mxu0 0.0
  %1376 = vmatpush1.msra.mxu0 0.0
  %1377 = vmatprep.subr.mxu0 0.0
  %1378 = vmatpush1.msra.mxu0 0.0
  %1379 = vmatprep.subr.mxu0 0.0
  %v1380 = vand.u32 %v865, 4294901760
  %v1381 = vsub.f32 %v865, %v1380
  %v1382 = vand.u32 %v1381, 4294901760
  %1383 = vmatpush1.msra.mxu0 %v1382
  %1384 = vmatprep.subr.mxu0 0.0
  %v1385 = vand.u32 %v864, 4294901760
  %v1386 = vsub.f32 %v864, %v1385
  %v1387 = vand.u32 %v1386, 4294901760
  %1388 = vmatpush1.msra.mxu0 %v1387
  %1389 = vmatprep.subr.mxu0 0.0
  %v1390 = vand.u32 %v863, 4294901760
  %v1391 = vsub.f32 %v863, %v1390
  %v1392 = vand.u32 %v1391, 4294901760
  %1393 = vmatpush1.msra.mxu0 %v1392
  %1394 = vmatprep.subr.mxu0 0.0
  %v1395 = vand.u32 %v862, 4294901760
  %v1396 = vsub.f32 %v862, %v1395
  %v1397 = vand.u32 %v1396, 4294901760
  %1398 = vmatpush1.msra.mxu0 %v1397
  %1399 = vmatprep.subr.mxu0 0.0
  %v1400 = vand.u32 %v861, 4294901760
  %v1401 = vsub.f32 %v861, %v1400
  %v1402 = vand.u32 %v1401, 4294901760
  %1403 = vmatpush1.msra.mxu0 %v1402
  %1404 = vmatprep.subr.mxu0 0.0
  %v1405 = vand.u32 %v860, 4294901760
  %v1406 = vsub.f32 %v860, %v1405
  %v1407 = vand.u32 %v1406, 4294901760
  %1408 = vmatpush1.msra.mxu0 %v1407
  %1409 = vmatprep.subr.mxu0 0.0
  %v1410 = vand.u32 %v859, 4294901760
  %v1411 = vsub.f32 %v859, %v1410
  %v1412 = vand.u32 %v1411, 4294901760
  %1413 = vmatpush1.msra.mxu0 %v1412
  %1414 = vmatprep.subr.mxu0 0.0
  %v1415 = vand.u32 %v858, 4294901760
  %v1416 = vsub.f32 %v858, %v1415
  %v1417 = vand.u32 %v1416, 4294901760
  %1418 = vmatpush1.msra.mxu0 %v1417
  %1419 = vmatprep.subr.mxu0 0.0
  %1420 = vmatpush2.msra.mxu0 0.0
  %1421 = vmatprep.subr.mxu0 0.0
  %1422 = vmatpush2.msra.mxu0 0.0
  %1423 = vmatprep.subr.mxu0 0.0
  %1424 = vmatpush2.msra.mxu0 0.0
  %1425 = vmatprep.subr.mxu0 0.0
  %1426 = vmatpush2.msra.mxu0 0.0
  %1427 = vmatprep.subr.mxu0 0.0
  %1428 = vmatpush2.msra.mxu0 0.0
  %1429 = vmatprep.subr.mxu0 0.0
  %1430 = vmatpush2.msra.mxu0 0.0
  %1431 = vmatprep.subr.mxu0 0.0
  %1432 = vmatpush2.msra.mxu0 0.0
  %1433 = vmatprep.subr.mxu0 0.0
  %1434 = vmatpush2.msra.mxu0 0.0
  %1435 = vmatprep.subr.mxu0 0.0
  %1436 = vmatpush2.msra.mxu0 0.0
  %1437 = vmatprep.subr.mxu0 0.0
  %1438 = vmatpush2.msra.mxu0 0.0
  %1439 = vmatprep.subr.mxu0 0.0
  %1440 = vmatpush2.msra.mxu0 0.0
  %1441 = vmatprep.subr.mxu0 0.0
  %1442 = vmatpush2.msra.mxu0 0.0
  %1443 = vmatprep.subr.mxu0 0.0
  %1444 = vmatpush2.msra.mxu0 0.0
  %1445 = vmatprep.subr.mxu0 0.0
  %1446 = vmatpush2.msra.mxu0 0.0
  %1447 = vmatprep.subr.mxu0 0.0
  %1448 = vmatpush2.msra.mxu0 0.0
  %1449 = vmatprep.subr.mxu0 0.0
  %1450 = vmatpush2.msra.mxu0 0.0
  %1451 = vmatprep.mubr.f32.mxu0 0.0
  %v1452 = vand.u32 %v896, 4294901760
  %1453 = vmatmul.mubr.f32.gmra.mxu0 %v1452
  %v1454 = vpop.f32.mrf.mxu0
  %v1455 = vadd.f32 %v1336, %v1454
  %v1456 = vpop.f32.mrf.mxu0
  %1457 = vmatprep.mubr.f32.mxu0 0.0
  %v1458 = vand.u32 %v899, 4294901760
  %1459 = vmatmul.mubr.f32.gmra.mxu0 %v1458
  %v1460 = vpop.f32.mrf.mxu0
  %v1461 = vadd.f32 %v1344, %v1460
  %v1462 = vpop.f32.mrf.mxu0
  %1463 = vmatprep.mubr.f32.mxu0 0.0
  %v1464 = vand.u32 %v902, 4294901760
  %1465 = vmatmul.mubr.f32.gmra.mxu0 %v1464
  %v1466 = vpop.f32.mrf.mxu0
  %v1467 = vadd.f32 %v1352, %v1466
  %v1468 = vpop.f32.mrf.mxu0
  %1469 = vmatprep.mubr.f32.mxu0 0.0
  %v1470 = vand.u32 %v905, 4294901760
  %1471 = vmatmul.mubr.f32.gmra.mxu0 %v1470
  %v1472 = vpop.f32.mrf.mxu0
  %v1473 = vadd.f32 %v1360, %v1472
  %v1474 = vpop.f32.mrf.mxu0
  %1475 = vdwg.mxu0
  %1476 = vmatprep.subr.mxu0 0.0
  %1477 = vmatpush1.msra.mxu0 0.0
  %1478 = vmatprep.subr.mxu0 0.0
  %1479 = vmatpush1.msra.mxu0 0.0
  %1480 = vmatprep.subr.mxu0 0.0
  %1481 = vmatpush1.msra.mxu0 0.0
  %1482 = vmatprep.subr.mxu0 0.0
  %1483 = vmatpush1.msra.mxu0 0.0
  %1484 = vmatprep.subr.mxu0 0.0
  %1485 = vmatpush1.msra.mxu0 0.0
  %1486 = vmatprep.subr.mxu0 0.0
  %1487 = vmatpush1.msra.mxu0 0.0
  %1488 = vmatprep.subr.mxu0 0.0
  %1489 = vmatpush1.msra.mxu0 0.0
  %1490 = vmatprep.subr.mxu0 0.0
  %1491 = vmatpush1.msra.mxu0 0.0
  %1492 = vmatprep.subr.mxu0 0.0
  %v1493 = vand.u32 %v865, 4294901760
  %1494 = vmatpush1.msra.mxu0 %v1493
  %1495 = vmatprep.subr.mxu0 0.0
  %v1496 = vand.u32 %v864, 4294901760
  %1497 = vmatpush1.msra.mxu0 %v1496
  %1498 = vmatprep.subr.mxu0 0.0
  %v1499 = vand.u32 %v863, 4294901760
  %1500 = vmatpush1.msra.mxu0 %v1499
  %1501 = vmatprep.subr.mxu0 0.0
  %v1502 = vand.u32 %v862, 4294901760
  %1503 = vmatpush1.msra.mxu0 %v1502
  %1504 = vmatprep.subr.mxu0 0.0
  %v1505 = vand.u32 %v861, 4294901760
  %1506 = vmatpush1.msra.mxu0 %v1505
  %1507 = vmatprep.subr.mxu0 0.0
  %v1508 = vand.u32 %v860, 4294901760
  %1509 = vmatpush1.msra.mxu0 %v1508
  %1510 = vmatprep.subr.mxu0 0.0
  %v1511 = vand.u32 %v859, 4294901760
  %1512 = vmatpush1.msra.mxu0 %v1511
  %1513 = vmatprep.subr.mxu0 0.0
  %v1514 = vand.u32 %v858, 4294901760
  %1515 = vmatpush1.msra.mxu0 %v1514
  %1516 = vmatprep.subr.mxu0 0.0
  %1517 = vmatpush2.msra.mxu0 0.0
  %1518 = vmatprep.subr.mxu0 0.0
  %1519 = vmatpush2.msra.mxu0 0.0
  %1520 = vmatprep.subr.mxu0 0.0
  %1521 = vmatpush2.msra.mxu0 0.0
  %1522 = vmatprep.subr.mxu0 0.0
  %1523 = vmatpush2.msra.mxu0 0.0
  %1524 = vmatprep.subr.mxu0 0.0
  %1525 = vmatpush2.msra.mxu0 0.0
  %1526 = vmatprep.subr.mxu0 0.0
  %1527 = vmatpush2.msra.mxu0 0.0
  %1528 = vmatprep.subr.mxu0 0.0
  %1529 = vmatpush2.msra.mxu0 0.0
  %1530 = vmatprep.subr.mxu0 0.0
  %1531 = vmatpush2.msra.mxu0 0.0
  %1532 = vmatprep.subr.mxu0 0.0
  %1533 = vmatpush2.msra.mxu0 0.0
  %1534 = vmatprep.subr.mxu0 0.0
  %1535 = vmatpush2.msra.mxu0 0.0
  %1536 = vmatprep.subr.mxu0 0.0
  %1537 = vmatpush2.msra.mxu0 0.0
  %1538 = vmatprep.subr.mxu0 0.0
  %1539 = vmatpush2.msra.mxu0 0.0
  %1540 = vmatprep.subr.mxu0 0.0
  %1541 = vmatpush2.msra.mxu0 0.0
  %1542 = vmatprep.subr.mxu0 0.0
  %1543 = vmatpush2.msra.mxu0 0.0
  %1544 = vmatprep.subr.mxu0 0.0
  %1545 = vmatpush2.msra.mxu0 0.0
  %1546 = vmatprep.subr.mxu0 0.0
  %1547 = vmatpush2.msra.mxu0 0.0
  %1548 = vmatprep.mubr.f32.mxu0 0.0
  %v1549 = vand.u32 %v896, 4294901760
  %1550 = vmatmul.mubr.f32.gmra.mxu0 %v1549
  %v1551 = vpop.f32.mrf.mxu0
  %v1552 = vadd.f32 %v1455, %v1551
  %v1553 = vpop.f32.mrf.mxu0
  %1554 = vmatprep.mubr.f32.mxu0 0.0
  %v1555 = vand.u32 %v899, 4294901760
  %1556 = vmatmul.mubr.f32.gmra.mxu0 %v1555
  %v1557 = vpop.f32.mrf.mxu0
  %v1558 = vadd.f32 %v1461, %v1557
  %v1559 = vpop.f32.mrf.mxu0
  %1560 = vmatprep.mubr.f32.mxu0 0.0
  %v1561 = vand.u32 %v902, 4294901760
  %1562 = vmatmul.mubr.f32.gmra.mxu0 %v1561
  %v1563 = vpop.f32.mrf.mxu0
  %v1564 = vadd.f32 %v1467, %v1563
  %v1565 = vpop.f32.mrf.mxu0
  %1566 = vmatprep.mubr.f32.mxu0 0.0
  %v1567 = vand.u32 %v905, 4294901760
  %1568 = vmatmul.mubr.f32.gmra.mxu0 %v1567
  %v1569 = vpop.f32.mrf.mxu0
  %v1570 = vadd.f32 %v1473, %v1569
  %v1571 = vpop.f32.mrf.mxu0
  %1572 = vdwg.mxu0
  %v1573 = vmax.f32 %v1552, 0.0
  %v1574 = vmax.f32 %v1558, 0.0
  %v1575 = vmax.f32 %v1564, 0.0
  %v1576 = vmax.f32 %v1570, 0.0
  %v1577 = vld [vmem:[%s5] sm:$0xff]
  %v1578 = vld [vmem:[%s5 + $0x8] sm:$0xff]
  %v1579 = vld [vmem:[%s6] sm:$0xff]
  %v1580 = vld [vmem:[%s6 + $0x8] sm:$0xff]
  %1582 = vset.pattern.permute.xlu0 0
  %1583 = vperm.xlu0 %1582, %v1579
  %v1584 = vpop.permute.xlu0 %1583
  %1587 = vset.pattern.permute.xlu0 0
  %1588 = vperm.xlu0 %1587, %v1580
  %v1589 = vpop.permute.xlu0 %1588
  %v1592 = vsel %vm83, %v1577, 0
  %v1595 = vsel %vm83, %v1578, 0
  %1597 = vmatprep.subr.mxu0 0.0
  %1598 = vmatpush1.msra.mxu0 0.0
  %1599 = vmatprep.subr.mxu0 0.0
  %1600 = vmatpush1.msra.mxu0 0.0
  %1601 = vmatprep.subr.mxu0 0.0
  %1602 = vmatpush1.msra.mxu0 0.0
  %1603 = vmatprep.subr.mxu0 0.0
  %1604 = vmatpush1.msra.mxu0 0.0
  %1605 = vmatprep.subr.mxu0 0.0
  %1606 = vmatpush1.msra.mxu0 0.0
  %1607 = vmatprep.subr.mxu0 0.0
  %1608 = vmatpush1.msra.mxu0 0.0
  %1609 = vmatprep.subr.mxu0 0.0
  %1610 = vmatpush1.msra.mxu0 0.0
  %1611 = vmatprep.subr.mxu0 0.0
  %1612 = vmatpush1.msra.mxu0 0.0
  %1613 = vmatprep.subr.mxu0 0.0
  %1614 = vmatpush1.msra.mxu0 0.0
  %1615 = vmatprep.subr.mxu0 0.0
  %1616 = vmatpush1.msra.mxu0 0.0
  %1617 = vmatprep.subr.mxu0 0.0
  %1618 = vmatpush1.msra.mxu0 0.0
  %1619 = vmatprep.subr.mxu0 0.0
  %1620 = vmatpush1.msra.mxu0 0.0
  %1621 = vmatprep.subr.mxu0 0.0
  %v1622 = vand.u32 %v1576, 4294901760
  %1623 = vmatpush1.msra.mxu0 %v1622
  %1624 = vmatprep.subr.mxu0 0.0
  %v1625 = vand.u32 %v1575, 4294901760
  %1626 = vmatpush1.msra.mxu0 %v1625
  %1627 = vmatprep.subr.mxu0 0.0
  %v1628 = vand.u32 %v1574, 4294901760
  %1629 = vmatpush1.msra.mxu0 %v1628
  %1630 = vmatprep.subr.mxu0 0.0
  %v1631 = vand.u32 %v1573, 4294901760
  %1632 = vmatpush1.msra.mxu0 %v1631
  %1633 = vmatprep.subr.mxu0 0.0
  %1634 = vmatpush2.msra.mxu0 0.0
  %1635 = vmatprep.subr.mxu0 0.0
  %1636 = vmatpush2.msra.mxu0 0.0
  %1637 = vmatprep.subr.mxu0 0.0
  %1638 = vmatpush2.msra.mxu0 0.0
  %1639 = vmatprep.subr.mxu0 0.0
  %1640 = vmatpush2.msra.mxu0 0.0
  %1641 = vmatprep.subr.mxu0 0.0
  %1642 = vmatpush2.msra.mxu0 0.0
  %1643 = vmatprep.subr.mxu0 0.0
  %1644 = vmatpush2.msra.mxu0 0.0
  %1645 = vmatprep.subr.mxu0 0.0
  %1646 = vmatpush2.msra.mxu0 0.0
  %1647 = vmatprep.subr.mxu0 0.0
  %1648 = vmatpush2.msra.mxu0 0.0
  %1649 = vmatprep.subr.mxu0 0.0
  %1650 = vmatpush2.msra.mxu0 0.0
  %1651 = vmatprep.subr.mxu0 0.0
  %1652 = vmatpush2.msra.mxu0 0.0
  %1653 = vmatprep.subr.mxu0 0.0
  %1654 = vmatpush2.msra.mxu0 0.0
  %1655 = vmatprep.subr.mxu0 0.0
  %1656 = vmatpush2.msra.mxu0 0.0
  %1657 = vmatprep.subr.mxu0 0.0
  %1658 = vmatpush2.msra.mxu0 0.0
  %1659 = vmatprep.subr.mxu0 0.0
  %1660 = vmatpush2.msra.mxu0 0.0
  %1661 = vmatprep.subr.mxu0 0.0
  %1662 = vmatpush2.msra.mxu0 0.0
  %1663 = vmatprep.subr.mxu0 0.0
  %1664 = vmatpush2.msra.mxu0 0.0
  %1665 = vmatprep.mubr.f32.mxu0 0.0
  %v1666 = vand.u32 %v1592, 4294901760
  %v1667 = vsub.f32 %v1592, %v1666
  %v1668 = vand.u32 %v1667, 4294901760
  %v1669 = vsub.f32 %v1667, %v1668
  %v1670 = vand.u32 %v1669, 4294901760
  %1671 = vmatmul.mubr.f32.gmra.mxu0 %v1670
  %v1672 = vpop.f32.mrf.mxu0
  %v1673 = vadd.f32 %v1584, %v1672
  %v1674 = vpop.f32.mrf.mxu0
  %1675 = vmatprep.mubr.f32.mxu0 0.0
  %v1676 = vand.u32 %v1595, 4294901760
  %v1677 = vsub.f32 %v1595, %v1676
  %v1678 = vand.u32 %v1677, 4294901760
  %v1679 = vsub.f32 %v1677, %v1678
  %v1680 = vand.u32 %v1679, 4294901760
  %1681 = vmatmul.mubr.f32.gmra.mxu0 %v1680
  %v1682 = vpop.f32.mrf.mxu0
  %v1683 = vadd.f32 %v1589, %v1682
  %v1684 = vpop.f32.mrf.mxu0
  %1685 = vdwg.mxu0
  %1686 = vmatprep.subr.mxu0 0.0
  %1687 = vmatpush1.msra.mxu0 0.0
  %1688 = vmatprep.subr.mxu0 0.0
  %1689 = vmatpush1.msra.mxu0 0.0
  %1690 = vmatprep.subr.mxu0 0.0
  %1691 = vmatpush1.msra.mxu0 0.0
  %1692 = vmatprep.subr.mxu0 0.0
  %1693 = vmatpush1.msra.mxu0 0.0
  %1694 = vmatprep.subr.mxu0 0.0
  %1695 = vmatpush1.msra.mxu0 0.0
  %1696 = vmatprep.subr.mxu0 0.0
  %1697 = vmatpush1.msra.mxu0 0.0
  %1698 = vmatprep.subr.mxu0 0.0
  %1699 = vmatpush1.msra.mxu0 0.0
  %1700 = vmatprep.subr.mxu0 0.0
  %1701 = vmatpush1.msra.mxu0 0.0
  %1702 = vmatprep.subr.mxu0 0.0
  %1703 = vmatpush1.msra.mxu0 0.0
  %1704 = vmatprep.subr.mxu0 0.0
  %1705 = vmatpush1.msra.mxu0 0.0
  %1706 = vmatprep.subr.mxu0 0.0
  %1707 = vmatpush1.msra.mxu0 0.0
  %1708 = vmatprep.subr.mxu0 0.0
  %1709 = vmatpush1.msra.mxu0 0.0
  %1710 = vmatprep.subr.mxu0 0.0
  %v1711 = vand.u32 %v1576, 4294901760
  %v1712 = vsub.f32 %v1576, %v1711
  %v1713 = vand.u32 %v1712, 4294901760
  %v1714 = vsub.f32 %v1712, %v1713
  %v1715 = vand.u32 %v1714, 4294901760
  %1716 = vmatpush1.msra.mxu0 %v1715
  %1717 = vmatprep.subr.mxu0 0.0
  %v1718 = vand.u32 %v1575, 4294901760
  %v1719 = vsub.f32 %v1575, %v1718
  %v1720 = vand.u32 %v1719, 4294901760
  %v1721 = vsub.f32 %v1719, %v1720
  %v1722 = vand.u32 %v1721, 4294901760
  %1723 = vmatpush1.msra.mxu0 %v1722
  %1724 = vmatprep.subr.mxu0 0.0
  %v1725 = vand.u32 %v1574, 4294901760
  %v1726 = vsub.f32 %v1574, %v1725
  %v1727 = vand.u32 %v1726, 4294901760
  %v1728 = vsub.f32 %v1726, %v1727
  %v1729 = vand.u32 %v1728, 4294901760
  %1730 = vmatpush1.msra.mxu0 %v1729
  %1731 = vmatprep.subr.mxu0 0.0
  %v1732 = vand.u32 %v1573, 4294901760
  %v1733 = vsub.f32 %v1573, %v1732
  %v1734 = vand.u32 %v1733, 4294901760
  %v1735 = vsub.f32 %v1733, %v1734
  %v1736 = vand.u32 %v1735, 4294901760
  %1737 = vmatpush1.msra.mxu0 %v1736
  %1738 = vmatprep.subr.mxu0 0.0
  %1739 = vmatpush2.msra.mxu0 0.0
  %1740 = vmatprep.subr.mxu0 0.0
  %1741 = vmatpush2.msra.mxu0 0.0
  %1742 = vmatprep.subr.mxu0 0.0
  %1743 = vmatpush2.msra.mxu0 0.0
  %1744 = vmatprep.subr.mxu0 0.0
  %1745 = vmatpush2.msra.mxu0 0.0
  %1746 = vmatprep.subr.mxu0 0.0
  %1747 = vmatpush2.msra.mxu0 0.0
  %1748 = vmatprep.subr.mxu0 0.0
  %1749 = vmatpush2.msra.mxu0 0.0
  %1750 = vmatprep.subr.mxu0 0.0
  %1751 = vmatpush2.msra.mxu0 0.0
  %1752 = vmatprep.subr.mxu0 0.0
  %1753 = vmatpush2.msra.mxu0 0.0
  %1754 = vmatprep.subr.mxu0 0.0
  %1755 = vmatpush2.msra.mxu0 0.0
  %1756 = vmatprep.subr.mxu0 0.0
  %1757 = vmatpush2.msra.mxu0 0.0
  %1758 = vmatprep.subr.mxu0 0.0
  %1759 = vmatpush2.msra.mxu0 0.0
  %1760 = vmatprep.subr.mxu0 0.0
  %1761 = vmatpush2.msra.mxu0 0.0
  %1762 = vmatprep.subr.mxu0 0.0
  %1763 = vmatpush2.msra.mxu0 0.0
  %1764 = vmatprep.subr.mxu0 0.0
  %1765 = vmatpush2.msra.mxu0 0.0
  %1766 = vmatprep.subr.mxu0 0.0
  %1767 = vmatpush2.msra.mxu0 0.0
  %1768 = vmatprep.subr.mxu0 0.0
  %1769 = vmatpush2.msra.mxu0 0.0
  %1770 = vmatprep.mubr.f32.mxu0 0.0
  %v1771 = vand.u32 %v1592, 4294901760
  %1772 = vmatmul.mubr.f32.gmra.mxu0 %v1771
  %v1773 = vpop.f32.mrf.mxu0
  %v1774 = vadd.f32 %v1673, %v1773
  %v1775 = vpop.f32.mrf.mxu0
  %1776 = vmatprep.mubr.f32.mxu0 0.0
  %v1777 = vand.u32 %v1595, 4294901760
  %1778 = vmatmul.mubr.f32.gmra.mxu0 %v1777
  %v1779 = vpop.f32.mrf.mxu0
  %v1780 = vadd.f32 %v1683, %v1779
  %v1781 = vpop.f32.mrf.mxu0
  %1782 = vdwg.mxu0
  %1783 = vmatprep.subr.mxu0 0.0
  %1784 = vmatpush1.msra.mxu0 0.0
  %1785 = vmatprep.subr.mxu0 0.0
  %1786 = vmatpush1.msra.mxu0 0.0
  %1787 = vmatprep.subr.mxu0 0.0
  %1788 = vmatpush1.msra.mxu0 0.0
  %1789 = vmatprep.subr.mxu0 0.0
  %1790 = vmatpush1.msra.mxu0 0.0
  %1791 = vmatprep.subr.mxu0 0.0
  %1792 = vmatpush1.msra.mxu0 0.0
  %1793 = vmatprep.subr.mxu0 0.0
  %1794 = vmatpush1.msra.mxu0 0.0
  %1795 = vmatprep.subr.mxu0 0.0
  %1796 = vmatpush1.msra.mxu0 0.0
  %1797 = vmatprep.subr.mxu0 0.0
  %1798 = vmatpush1.msra.mxu0 0.0
  %1799 = vmatprep.subr.mxu0 0.0
  %1800 = vmatpush1.msra.mxu0 0.0
  %1801 = vmatprep.subr.mxu0 0.0
  %1802 = vmatpush1.msra.mxu0 0.0
  %1803 = vmatprep.subr.mxu0 0.0
  %1804 = vmatpush1.msra.mxu0 0.0
  %1805 = vmatprep.subr.mxu0 0.0
  %1806 = vmatpush1.msra.mxu0 0.0
  %1807 = vmatprep.subr.mxu0 0.0
  %v1808 = vand.u32 %v1576, 4294901760
  %v1809 = vsub.f32 %v1576, %v1808
  %1810 = vmatpush1.msra.mxu0 %v1809
  %1811 = vmatprep.subr.mxu0 0.0
  %v1812 = vand.u32 %v1575, 4294901760
  %v1813 = vsub.f32 %v1575, %v1812
  %1814 = vmatpush1.msra.mxu0 %v1813
  %1815 = vmatprep.subr.mxu0 0.0
  %v1816 = vand.u32 %v1574, 4294901760
  %v1817 = vsub.f32 %v1574, %v1816
  %1818 = vmatpush1.msra.mxu0 %v1817
  %1819 = vmatprep.subr.mxu0 0.0
  %v1820 = vand.u32 %v1573, 4294901760
  %v1821 = vsub.f32 %v1573, %v1820
  %1822 = vmatpush1.msra.mxu0 %v1821
  %1823 = vmatprep.subr.mxu0 0.0
  %1824 = vmatpush2.msra.mxu0 0.0
  %1825 = vmatprep.subr.mxu0 0.0
  %1826 = vmatpush2.msra.mxu0 0.0
  %1827 = vmatprep.subr.mxu0 0.0
  %1828 = vmatpush2.msra.mxu0 0.0
  %1829 = vmatprep.subr.mxu0 0.0
  %1830 = vmatpush2.msra.mxu0 0.0
  %1831 = vmatprep.subr.mxu0 0.0
  %1832 = vmatpush2.msra.mxu0 0.0
  %1833 = vmatprep.subr.mxu0 0.0
  %1834 = vmatpush2.msra.mxu0 0.0
  %1835 = vmatprep.subr.mxu0 0.0
  %1836 = vmatpush2.msra.mxu0 0.0
  %1837 = vmatprep.subr.mxu0 0.0
  %1838 = vmatpush2.msra.mxu0 0.0
  %1839 = vmatprep.subr.mxu0 0.0
  %1840 = vmatpush2.msra.mxu0 0.0
  %1841 = vmatprep.subr.mxu0 0.0
  %1842 = vmatpush2.msra.mxu0 0.0
  %1843 = vmatprep.subr.mxu0 0.0
  %1844 = vmatpush2.msra.mxu0 0.0
  %1845 = vmatprep.subr.mxu0 0.0
  %1846 = vmatpush2.msra.mxu0 0.0
  %1847 = vmatprep.subr.mxu0 0.0
  %1848 = vmatpush2.msra.mxu0 0.0
  %1849 = vmatprep.subr.mxu0 0.0
  %1850 = vmatpush2.msra.mxu0 0.0
  %1851 = vmatprep.subr.mxu0 0.0
  %1852 = vmatpush2.msra.mxu0 0.0
  %1853 = vmatprep.subr.mxu0 0.0
  %1854 = vmatpush2.msra.mxu0 0.0
  %1855 = vmatprep.mubr.f32.mxu0 0.0
  %v1856 = vand.u32 %v1592, 4294901760
  %v1857 = vsub.f32 %v1592, %v1856
  %1858 = vmatmul.mubr.f32.gmra.mxu0 %v1857
  %v1859 = vpop.f32.mrf.mxu0
  %v1860 = vadd.f32 %v1774, %v1859
  %v1861 = vpop.f32.mrf.mxu0
  %1862 = vmatprep.mubr.f32.mxu0 0.0
  %v1863 = vand.u32 %v1595, 4294901760
  %v1864 = vsub.f32 %v1595, %v1863
  %1865 = vmatmul.mubr.f32.gmra.mxu0 %v1864
  %v1866 = vpop.f32.mrf.mxu0
  %v1867 = vadd.f32 %v1780, %v1866
  %v1868 = vpop.f32.mrf.mxu0
  %1869 = vdwg.mxu0
  %1870 = vmatprep.subr.mxu0 0.0
  %1871 = vmatpush1.msra.mxu0 0.0
  %1872 = vmatprep.subr.mxu0 0.0
  %1873 = vmatpush1.msra.mxu0 0.0
  %1874 = vmatprep.subr.mxu0 0.0
  %1875 = vmatpush1.msra.mxu0 0.0
  %1876 = vmatprep.subr.mxu0 0.0
  %1877 = vmatpush1.msra.mxu0 0.0
  %1878 = vmatprep.subr.mxu0 0.0
  %1879 = vmatpush1.msra.mxu0 0.0
  %1880 = vmatprep.subr.mxu0 0.0
  %1881 = vmatpush1.msra.mxu0 0.0
  %1882 = vmatprep.subr.mxu0 0.0
  %1883 = vmatpush1.msra.mxu0 0.0
  %1884 = vmatprep.subr.mxu0 0.0
  %1885 = vmatpush1.msra.mxu0 0.0
  %1886 = vmatprep.subr.mxu0 0.0
  %1887 = vmatpush1.msra.mxu0 0.0
  %1888 = vmatprep.subr.mxu0 0.0
  %1889 = vmatpush1.msra.mxu0 0.0
  %1890 = vmatprep.subr.mxu0 0.0
  %1891 = vmatpush1.msra.mxu0 0.0
  %1892 = vmatprep.subr.mxu0 0.0
  %1893 = vmatpush1.msra.mxu0 0.0
  %1894 = vmatprep.subr.mxu0 0.0
  %v1895 = vand.u32 %v1576, 4294901760
  %1896 = vmatpush1.msra.mxu0 %v1895
  %1897 = vmatprep.subr.mxu0 0.0
  %v1898 = vand.u32 %v1575, 4294901760
  %1899 = vmatpush1.msra.mxu0 %v1898
  %1900 = vmatprep.subr.mxu0 0.0
  %v1901 = vand.u32 %v1574, 4294901760
  %1902 = vmatpush1.msra.mxu0 %v1901
  %1903 = vmatprep.subr.mxu0 0.0
  %v1904 = vand.u32 %v1573, 4294901760
  %1905 = vmatpush1.msra.mxu0 %v1904
  %1906 = vmatprep.subr.mxu0 0.0
  %1907 = vmatpush2.msra.mxu0 0.0
  %1908 = vmatprep.subr.mxu0 0.0
  %1909 = vmatpush2.msra.mxu0 0.0
  %1910 = vmatprep.subr.mxu0 0.0
  %1911 = vmatpush2.msra.mxu0 0.0
  %1912 = vmatprep.subr.mxu0 0.0
  %1913 = vmatpush2.msra.mxu0 0.0
  %1914 = vmatprep.subr.mxu0 0.0
  %1915 = vmatpush2.msra.mxu0 0.0
  %1916 = vmatprep.subr.mxu0 0.0
  %1917 = vmatpush2.msra.mxu0 0.0
  %1918 = vmatprep.subr.mxu0 0.0
  %1919 = vmatpush2.msra.mxu0 0.0
  %1920 = vmatprep.subr.mxu0 0.0
  %1921 = vmatpush2.msra.mxu0 0.0
  %1922 = vmatprep.subr.mxu0 0.0
  %1923 = vmatpush2.msra.mxu0 0.0
  %1924 = vmatprep.subr.mxu0 0.0
  %1925 = vmatpush2.msra.mxu0 0.0
  %1926 = vmatprep.subr.mxu0 0.0
  %1927 = vmatpush2.msra.mxu0 0.0
  %1928 = vmatprep.subr.mxu0 0.0
  %1929 = vmatpush2.msra.mxu0 0.0
  %1930 = vmatprep.subr.mxu0 0.0
  %1931 = vmatpush2.msra.mxu0 0.0
  %1932 = vmatprep.subr.mxu0 0.0
  %1933 = vmatpush2.msra.mxu0 0.0
  %1934 = vmatprep.subr.mxu0 0.0
  %1935 = vmatpush2.msra.mxu0 0.0
  %1936 = vmatprep.subr.mxu0 0.0
  %1937 = vmatpush2.msra.mxu0 0.0
  %1938 = vmatprep.mubr.f32.mxu0 0.0
  %v1939 = vand.u32 %v1592, 4294901760
  %v1940 = vsub.f32 %v1592, %v1939
  %v1941 = vand.u32 %v1940, 4294901760
  %1942 = vmatmul.mubr.f32.gmra.mxu0 %v1941
  %v1943 = vpop.f32.mrf.mxu0
  %v1944 = vadd.f32 %v1860, %v1943
  %v1945 = vpop.f32.mrf.mxu0
  %1946 = vmatprep.mubr.f32.mxu0 0.0
  %v1947 = vand.u32 %v1595, 4294901760
  %v1948 = vsub.f32 %v1595, %v1947
  %v1949 = vand.u32 %v1948, 4294901760
  %1950 = vmatmul.mubr.f32.gmra.mxu0 %v1949
  %v1951 = vpop.f32.mrf.mxu0
  %v1952 = vadd.f32 %v1867, %v1951
  %v1953 = vpop.f32.mrf.mxu0
  %1954 = vdwg.mxu0
  %1955 = vmatprep.subr.mxu0 0.0
  %1956 = vmatpush1.msra.mxu0 0.0
  %1957 = vmatprep.subr.mxu0 0.0
  %1958 = vmatpush1.msra.mxu0 0.0
  %1959 = vmatprep.subr.mxu0 0.0
  %1960 = vmatpush1.msra.mxu0 0.0
  %1961 = vmatprep.subr.mxu0 0.0
  %1962 = vmatpush1.msra.mxu0 0.0
  %1963 = vmatprep.subr.mxu0 0.0
  %1964 = vmatpush1.msra.mxu0 0.0
  %1965 = vmatprep.subr.mxu0 0.0
  %1966 = vmatpush1.msra.mxu0 0.0
  %1967 = vmatprep.subr.mxu0 0.0
  %1968 = vmatpush1.msra.mxu0 0.0
  %1969 = vmatprep.subr.mxu0 0.0
  %1970 = vmatpush1.msra.mxu0 0.0
  %1971 = vmatprep.subr.mxu0 0.0
  %1972 = vmatpush1.msra.mxu0 0.0
  %1973 = vmatprep.subr.mxu0 0.0
  %1974 = vmatpush1.msra.mxu0 0.0
  %1975 = vmatprep.subr.mxu0 0.0
  %1976 = vmatpush1.msra.mxu0 0.0
  %1977 = vmatprep.subr.mxu0 0.0
  %1978 = vmatpush1.msra.mxu0 0.0
  %1979 = vmatprep.subr.mxu0 0.0
  %v1980 = vand.u32 %v1576, 4294901760
  %v1981 = vsub.f32 %v1576, %v1980
  %v1982 = vand.u32 %v1981, 4294901760
  %1983 = vmatpush1.msra.mxu0 %v1982
  %1984 = vmatprep.subr.mxu0 0.0
  %v1985 = vand.u32 %v1575, 4294901760
  %v1986 = vsub.f32 %v1575, %v1985
  %v1987 = vand.u32 %v1986, 4294901760
  %1988 = vmatpush1.msra.mxu0 %v1987
  %1989 = vmatprep.subr.mxu0 0.0
  %v1990 = vand.u32 %v1574, 4294901760
  %v1991 = vsub.f32 %v1574, %v1990
  %v1992 = vand.u32 %v1991, 4294901760
  %1993 = vmatpush1.msra.mxu0 %v1992
  %1994 = vmatprep.subr.mxu0 0.0
  %v1995 = vand.u32 %v1573, 4294901760
  %v1996 = vsub.f32 %v1573, %v1995
  %v1997 = vand.u32 %v1996, 4294901760
  %1998 = vmatpush1.msra.mxu0 %v1997
  %1999 = vmatprep.subr.mxu0 0.0
  %2000 = vmatpush2.msra.mxu0 0.0
  %2001 = vmatprep.subr.mxu0 0.0
  %2002 = vmatpush2.msra.mxu0 0.0
  %2003 = vmatprep.subr.mxu0 0.0
  %2004 = vmatpush2.msra.mxu0 0.0
  %2005 = vmatprep.subr.mxu0 0.0
  %2006 = vmatpush2.msra.mxu0 0.0
  %2007 = vmatprep.subr.mxu0 0.0
  %2008 = vmatpush2.msra.mxu0 0.0
  %2009 = vmatprep.subr.mxu0 0.0
  %2010 = vmatpush2.msra.mxu0 0.0
  %2011 = vmatprep.subr.mxu0 0.0
  %2012 = vmatpush2.msra.mxu0 0.0
  %2013 = vmatprep.subr.mxu0 0.0
  %2014 = vmatpush2.msra.mxu0 0.0
  %2015 = vmatprep.subr.mxu0 0.0
  %2016 = vmatpush2.msra.mxu0 0.0
  %2017 = vmatprep.subr.mxu0 0.0
  %2018 = vmatpush2.msra.mxu0 0.0
  %2019 = vmatprep.subr.mxu0 0.0
  %2020 = vmatpush2.msra.mxu0 0.0
  %2021 = vmatprep.subr.mxu0 0.0
  %2022 = vmatpush2.msra.mxu0 0.0
  %2023 = vmatprep.subr.mxu0 0.0
  %2024 = vmatpush2.msra.mxu0 0.0
  %2025 = vmatprep.subr.mxu0 0.0
  %2026 = vmatpush2.msra.mxu0 0.0
  %2027 = vmatprep.subr.mxu0 0.0
  %2028 = vmatpush2.msra.mxu0 0.0
  %2029 = vmatprep.subr.mxu0 0.0
  %2030 = vmatpush2.msra.mxu0 0.0
  %2031 = vmatprep.mubr.f32.mxu0 0.0
  %v2032 = vand.u32 %v1592, 4294901760
  %2033 = vmatmul.mubr.f32.gmra.mxu0 %v2032
  %v2034 = vpop.f32.mrf.mxu0
  %v2035 = vadd.f32 %v1944, %v2034
  %v2036 = vpop.f32.mrf.mxu0
  %2037 = vmatprep.mubr.f32.mxu0 0.0
  %v2038 = vand.u32 %v1595, 4294901760
  %2039 = vmatmul.mubr.f32.gmra.mxu0 %v2038
  %v2040 = vpop.f32.mrf.mxu0
  %v2041 = vadd.f32 %v1952, %v2040
  %v2042 = vpop.f32.mrf.mxu0
  %2043 = vdwg.mxu0
  %2044 = vmatprep.subr.mxu0 0.0
  %2045 = vmatpush1.msra.mxu0 0.0
  %2046 = vmatprep.subr.mxu0 0.0
  %2047 = vmatpush1.msra.mxu0 0.0
  %2048 = vmatprep.subr.mxu0 0.0
  %2049 = vmatpush1.msra.mxu0 0.0
  %2050 = vmatprep.subr.mxu0 0.0
  %2051 = vmatpush1.msra.mxu0 0.0
  %2052 = vmatprep.subr.mxu0 0.0
  %2053 = vmatpush1.msra.mxu0 0.0
  %2054 = vmatprep.subr.mxu0 0.0
  %2055 = vmatpush1.msra.mxu0 0.0
  %2056 = vmatprep.subr.mxu0 0.0
  %2057 = vmatpush1.msra.mxu0 0.0
  %2058 = vmatprep.subr.mxu0 0.0
  %2059 = vmatpush1.msra.mxu0 0.0
  %2060 = vmatprep.subr.mxu0 0.0
  %2061 = vmatpush1.msra.mxu0 0.0
  %2062 = vmatprep.subr.mxu0 0.0
  %2063 = vmatpush1.msra.mxu0 0.0
  %2064 = vmatprep.subr.mxu0 0.0
  %2065 = vmatpush1.msra.mxu0 0.0
  %2066 = vmatprep.subr.mxu0 0.0
  %2067 = vmatpush1.msra.mxu0 0.0
  %2068 = vmatprep.subr.mxu0 0.0
  %v2069 = vand.u32 %v1576, 4294901760
  %2070 = vmatpush1.msra.mxu0 %v2069
  %2071 = vmatprep.subr.mxu0 0.0
  %v2072 = vand.u32 %v1575, 4294901760
  %2073 = vmatpush1.msra.mxu0 %v2072
  %2074 = vmatprep.subr.mxu0 0.0
  %v2075 = vand.u32 %v1574, 4294901760
  %2076 = vmatpush1.msra.mxu0 %v2075
  %2077 = vmatprep.subr.mxu0 0.0
  %v2078 = vand.u32 %v1573, 4294901760
  %2079 = vmatpush1.msra.mxu0 %v2078
  %2080 = vmatprep.subr.mxu0 0.0
  %2081 = vmatpush2.msra.mxu0 0.0
  %2082 = vmatprep.subr.mxu0 0.0
  %2083 = vmatpush2.msra.mxu0 0.0
  %2084 = vmatprep.subr.mxu0 0.0
  %2085 = vmatpush2.msra.mxu0 0.0
  %2086 = vmatprep.subr.mxu0 0.0
  %2087 = vmatpush2.msra.mxu0 0.0
  %2088 = vmatprep.subr.mxu0 0.0
  %2089 = vmatpush2.msra.mxu0 0.0
  %2090 = vmatprep.subr.mxu0 0.0
  %2091 = vmatpush2.msra.mxu0 0.0
  %2092 = vmatprep.subr.mxu0 0.0
  %2093 = vmatpush2.msra.mxu0 0.0
  %2094 = vmatprep.subr.mxu0 0.0
  %2095 = vmatpush2.msra.mxu0 0.0
  %2096 = vmatprep.subr.mxu0 0.0
  %2097 = vmatpush2.msra.mxu0 0.0
  %2098 = vmatprep.subr.mxu0 0.0
  %2099 = vmatpush2.msra.mxu0 0.0
  %2100 = vmatprep.subr.mxu0 0.0
  %2101 = vmatpush2.msra.mxu0 0.0
  %2102 = vmatprep.subr.mxu0 0.0
  %2103 = vmatpush2.msra.mxu0 0.0
  %2104 = vmatprep.subr.mxu0 0.0
  %2105 = vmatpush2.msra.mxu0 0.0
  %2106 = vmatprep.subr.mxu0 0.0
  %2107 = vmatpush2.msra.mxu0 0.0
  %2108 = vmatprep.subr.mxu0 0.0
  %2109 = vmatpush2.msra.mxu0 0.0
  %2110 = vmatprep.subr.mxu0 0.0
  %2111 = vmatpush2.msra.mxu0 0.0
  %2112 = vmatprep.mubr.f32.mxu0 0.0
  %v2113 = vand.u32 %v1592, 4294901760
  %2114 = vmatmul.mubr.f32.gmra.mxu0 %v2113
  %v2115 = vpop.f32.mrf.mxu0
  %v2116 = vadd.f32 %v2035, %v2115
  %v2117 = vpop.f32.mrf.mxu0
  %2118 = vmatprep.mubr.f32.mxu0 0.0
  %v2119 = vand.u32 %v1595, 4294901760
  %2120 = vmatmul.mubr.f32.gmra.mxu0 %v2119
  %v2121 = vpop.f32.mrf.mxu0
  %v2122 = vadd.f32 %v2041, %v2121
  %v2123 = vpop.f32.mrf.mxu0
  %2124 = vdwg.mxu0
  %vm2125 = vcmask 64512
  %v2126 = vsel %vm2125, %v2116, -inf
  %v2127 = vsel %vm2125, %v2122, -inf
  %v2128 = vmax.f32 %v2126, %v2127
  %v2129 = vrot.slane %v2128, 4
  %v2130 = vmax.f32 %v2128, %v2129
  %v2131 = vrot.slane %v2130, 2
  %v2132 = vmax.f32 %v2130, %v2131
  %v2133 = vrot.slane %v2132, 1
  %v2134 = vmax.f32 %v2132, %v2133
  %v2135 = vsub.f32 %v2116, %v2134
  %v2136 = vsub.f32 %v2122, %v2134
  %v2137 = vmul.f32 %v2135, 1.442695
  %v2138 = vpow.pop %v2137
  %v2139 = vmul.f32 %v2136, 1.442695
  %v2140 = vpow.pop %v2139
  %v2141 = vsel %vm2125, %v2138, 0.0
  %v2142 = vsel %vm2125, %v2140, 0.0
  %v2143 = vadd.f32 %v2141, %v2142
  %v2144 = vrot.slane %v2143, 4
  %v2145 = vadd.f32 %v2143, %v2144
  %v2146 = vrot.slane %v2145, 2
  %v2147 = vadd.f32 %v2145, %v2146
  %v2148 = vrot.slane %v2147, 1
  %v2149 = vadd.f32 %v2147, %v2148
  %v2150 = vrcp.pop %v2149
  %v2151 = vmul.f32 %v2138, %v2150
  %v2152 = vmul.f32 %v2140, %v2150
  %2153 = vst.msk [vmem:[%s7] sm:$0xff] %vm2125, %v2151
  %2154 = vst.msk [vmem:[%s7 + $0x8] sm:$0xff] %vm2125, %v2152
  // Predicated region
  $region30: #{tpu_custom_call.1} parent=0 // pred_check
    _
  $region31: #{tpu_custom_call.1} parent=0 // pred_check_branch
    %2156 = sbr.rel (0) target = $region33
  $region32: #{tpu_custom_call.1} parent=0 // pred_region
    _
  $region33: #{tpu_custom_call.1} parent=0 // pred_fallthru
    _
  // Predicated region
  $region34: #{tpu_custom_call.1} parent=0 // pred_check
    _
  $region35: #{tpu_custom_call.1} parent=0 // pred_check_branch
    %2158 = sbr.rel (0) target = $region37
  $region36: #{tpu_custom_call.1} parent=0 // pred_region
    _
  $region37: #{tpu_custom_call.1} parent=0 // pred_fallthru
    _

</llo_original>
